<compile_context>
chip_gen: v5e
topology: v5e:2x2
jax: 0.10.0
libtpu: 0.0.40
codegen_flags: <defaults>
</compile_context>

<pallas_src>
import functools

import jax
import jax.numpy as jnp
from jax import lax
from jax.experimental import pallas as pl
from jax.experimental.pallas import tpu as pltpu


def _layernorm(x, g, b, eps=1e-5):
    mu = jnp.mean(x, axis=-1, keepdims=True)
    var = jnp.mean((x - mu) ** 2, axis=-1, keepdims=True)
    return (x - mu) * lax.rsqrt(var + eps) * g + b


# --------------------------------------------------------------------------- #
# Block (transformer layer) kernel
# --------------------------------------------------------------------------- #
def block_kernel(x_ref,
                 ln1g_ref, ln1b_ref, ln2g_ref, ln2b_ref,
                 wqkv_ref, bqkv_ref, wproj_ref, bproj_ref,
                 w1_ref, b1_ref, w2_ref, b2_ref,
                 out_ref,
                 qkvh_ref, acc_ref, *, heads):
    h_idx = pl.program_id(1)
    N, C = acc_ref.shape
    hd = C // heads

    # ---- once per batch element: LN1 + full-width QKV projection ----------
    @pl.when(h_idx == 0)
    def _init():
        x = x_ref[0].astype(jnp.float32)                       # (N, C)
        hb = _layernorm(x, ln1g_ref[...], ln1b_ref[...]).astype(jnp.bfloat16)
        qkv = jnp.dot(hb, wqkv_ref[...],
                      preferred_element_type=jnp.float32) + bqkv_ref[...]
        qkv = qkv.astype(jnp.bfloat16)                         # (N, 3C)
        # Split into per-head (N, hd) slabs once; later steps index by head
        # (static first-axis index -> no lane slicing in the per-head path).
        for hh in range(heads):
            qkvh_ref[3 * hh + 0] = qkv[:, 0 * C + hh * hd:0 * C + (hh + 1) * hd]
            qkvh_ref[3 * hh + 1] = qkv[:, 1 * C + hh * hd:1 * C + (hh + 1) * hd]
            qkvh_ref[3 * hh + 2] = qkv[:, 2 * C + hh * hd:2 * C + (hh + 1) * hd]
        acc_ref[...] = jnp.zeros_like(acc_ref)

    # ---- one attention head per grid step ----------------------------------
    base = 3 * h_idx
    qh = qkvh_ref[base]                                        # (N, hd) bf16
    kh = qkvh_ref[base + 1]
    vh = qkvh_ref[base + 2]

    # NOTE: no 1/sqrt(head_dim) scaling -- matches the reference PyTorch code.
    s = lax.dot_general(qh, kh, (((1,), (1,)), ((), ())),
                        preferred_element_type=jnp.float32)    # (N, N) = q @ k.T
    s = s - jnp.max(s, axis=-1, keepdims=True)
    p = jnp.exp(s)
    p = p * pl.reciprocal(jnp.sum(p, axis=-1, keepdims=True), approx=True)

    o = jnp.dot(p.astype(jnp.bfloat16), vh,
                preferred_element_type=jnp.float32)            # (N, hd)
    # Fold this head straight into the output projection (replaces concat).
    acc_ref[...] += jnp.dot(o.astype(jnp.bfloat16), wproj_ref[0],
                            preferred_element_type=jnp.float32)

    # ---- after the last head: proj bias, residual, LN2 + MLP, residual -----
    @pl.when(h_idx == heads - 1)
    def _finalize():
        x = x_ref[0].astype(jnp.float32)
        x1 = x + acc_ref[...] + bproj_ref[...]                 # residual 1
        h2 = _layernorm(x1, ln2g_ref[...], ln2b_ref[...]).astype(jnp.bfloat16)
        f = jnp.dot(h2, w1_ref[...],
                    preferred_element_type=jnp.float32) + b1_ref[...]
        f = 0.5 * f * (1.0 + lax.erf(f * 0.7071067811865476))  # exact GELU
        f = jnp.dot(f.astype(jnp.bfloat16), w2_ref[...],
                    preferred_element_type=jnp.float32) + b2_ref[...]
        out_ref[0] = (x1 + f).astype(out_ref.dtype)            # residual 2


def block_forward(x, params, heads):
    """x: (B, N, C) float32.  params: dict from init_block_params."""
    B, N, C = x.shape
    assert C % heads == 0
    hd = C // heads
    mlp = params["w1"].shape[1]

    # MXU operands in bf16; biases / LN params stay f32.
    wqkv = params["wqkv"].astype(jnp.bfloat16)                        # (C, 3C)
    wproj_h = params["wproj"].reshape(heads, hd, C).astype(jnp.bfloat16)
    w1 = params["w1"].astype(jnp.bfloat16)
    w2 = params["w2"].astype(jnp.bfloat16)

    def const_spec(shape):
        return pl.BlockSpec(shape, lambda b, h: (0,) * len(shape))

    flops = B * (6 * N * C * C + 4 * N * N * C + 2 * N * C * C + 4 * N * C * mlp)
    transcendentals = B * (heads * N * N + N * mlp)
    bytes_accessed = (2 * B * N * C * 4                               # x in + out
                      + 2 * (3 * C * C + C * C + 2 * C * mlp)         # bf16 weights
                      + 4 * (8 * C + 3 * C + mlp))                    # f32 vectors

    grid_spec = pltpu.PrefetchScalarGridSpec(
        num_scalar_prefetch=0,
        grid=(B, heads),
        in_specs=[
            pl.BlockSpec((1, N, C), lambda b, h: (b, 0, 0)),          # x
            const_spec((1, C)), const_spec((1, C)),                   # ln1 g, b
            const_spec((1, C)), const_spec((1, C)),                   # ln2 g, b
            const_spec((C, 3 * C)),                                   # wqkv  (bf16)
            const_spec((1, 3 * C)),                                   # bqkv
            pl.BlockSpec((1, hd, C), lambda b, h: (h, 0, 0)),         # wproj per head
            const_spec((1, C)),                                       # bproj
            const_spec((C, mlp)), const_spec((1, mlp)),               # fc1
            const_spec((mlp, C)), const_spec((1, C)),                 # fc2
        ],
        out_specs=pl.BlockSpec((1, N, C), lambda b, h: (b, 0, 0)),
        scratch_shapes=[
            pltpu.VMEM((3 * heads, N, hd), jnp.bfloat16),             # per-head q/k/v
            pltpu.VMEM((N, C), jnp.float32),                          # proj accumulator
        ],
    )

    return pl.pallas_call(
        functools.partial(block_kernel, heads=heads),
        out_shape=jax.ShapeDtypeStruct((B, N, C), x.dtype),
        grid_spec=grid_spec,
        compiler_params=pltpu.CompilerParams(
            dimension_semantics=("parallel", "arbitrary"),
            vmem_limit_bytes=32 * 1024 * 1024),
        cost_estimate=pl.CostEstimate(flops=flops,
                                      transcendentals=transcendentals,
                                      bytes_accessed=bytes_accessed),
    )(x,
      params["ln1_g"], params["ln1_b"], params["ln2_g"], params["ln2_b"],
      wqkv, params["bqkv"], wproj_h, params["bproj"],
      w1, params["b1"], w2, params["b2"])


# --------------------------------------------------------------------------- #
# MaskTransformer decoder-head kernel
#   decoder_norm -> proj_patch / proj_classes -> L2-normalise ->
#   domain_masks = class_norm(features @ classes^T)
# --------------------------------------------------------------------------- #
def decoder_head_kernel(x_ref, dng_ref, dnb_ref, pp_ref, pc_ref,
                        cng_ref, cnb_ref,
                        feat_ref, mask_ref, *, n_cls):
    x = x_ref[0].astype(jnp.float32)                           # (Nt, C)
    Nt, C = x.shape
    Np = Nt - n_cls

    xn = _layernorm(x, dng_ref[...], dnb_ref[...])             # decoder_norm
    patches = xn[:Np].astype(jnp.bfloat16)                     # (Np, C)
    cls_tok = xn[Np:].astype(jnp.bfloat16)                     # (n_cls, C)

    feat = jnp.dot(patches, pp_ref[...],
                   preferred_element_type=jnp.float32)         # (Np, C)
    clsf = jnp.dot(cls_tok, pc_ref[...],
                   preferred_element_type=jnp.float32)         # (n_cls, C)

    feat = feat * lax.rsqrt(jnp.sum(feat * feat, axis=-1, keepdims=True))
    clsf = clsf * lax.rsqrt(jnp.sum(clsf * clsf, axis=-1, keepdims=True))

    dm = lax.dot_general(feat.astype(jnp.bfloat16), clsf.astype(jnp.bfloat16),
                         (((1,), (1,)), ((), ())),
                         preferred_element_type=jnp.float32)   # (Np, n_cls)
    dm = _layernorm(dm, cng_ref[...], cnb_ref[...])            # class_norm

    feat_ref[0] = feat.astype(feat_ref.dtype)
    mask_ref[0] = dm.astype(mask_ref.dtype)


def decoder_head_forward(x, params, n_cls):
    """x: (B, Nt, C) output of the block stack (patches + class tokens)."""
    B, Nt, C = x.shape
    Np = Nt - n_cls
    pp = params["proj_patch"].astype(jnp.bfloat16)
    pc = params["proj_classes"].astype(jnp.bfloat16)

    def const_spec(shape):
        return pl.BlockSpec(shape, lambda b: (0,) * len(shape))

    grid_spec = pltpu.PrefetchScalarGridSpec(
        num_scalar_prefetch=0,
        grid=(B,),
        in_specs=[
            pl.BlockSpec((1, Nt, C), lambda b: (b, 0, 0)),            # x
            const_spec((1, C)), const_spec((1, C)),                   # decoder_norm
            const_spec((C, C)), const_spec((C, C)),                   # proj_patch/classes
            const_spec((1, n_cls)), const_spec((1, n_cls)),           # class_norm
        ],
        out_specs=[
            pl.BlockSpec((1, Np, C), lambda b: (b, 0, 0)),            # features (L2-norm'd)
            pl.BlockSpec((1, Np, n_cls), lambda b: (b, 0, 0)),        # domain_masks
        ],
    )

    return pl.pallas_call(
        functools.partial(decoder_head_kernel, n_cls=n_cls),
        out_shape=(jax.ShapeDtypeStruct((B, Np, C), jnp.float32),
                   jax.ShapeDtypeStruct((B, Np, n_cls), jnp.float32)),
        grid_spec=grid_spec,
        compiler_params=pltpu.CompilerParams(
            dimension_semantics=("parallel",),
            vmem_limit_bytes=32 * 1024 * 1024),
    )(x, params["dn_g"], params["dn_b"], pp, pc,
      params["cn_g"], params["cn_b"])


def mask_transformer_forward(s, params, heads, bias=None):
    """MaskTransformer trunk: cls-emb concat -> blocks -> decoder head.

    `bias` is accepted but ignored: in the PyTorch source it is passed into
    Block's unused `mask` argument, so it never reaches the attention scores.
    Returns (features, domain_masks).
    """
    del bias
    B, Np, C = s.shape
    n_cls = params["cls_emb"].shape[1]
    cls_emb = jnp.broadcast_to(params["cls_emb"], (B, n_cls, C))
    x = jnp.concatenate([s, cls_emb], axis=1)                  # (B, Np+n_cls, C)
    for blk_params in params["blocks"]:
        x = block_forward(x, blk_params, heads)
    feat, masks = decoder_head_forward(x, params, n_cls)
    # TODO(synk): bg_gru / conf_gru / conf_gru_all (bidirectional GRUs), argmax
    #             + clean_domains/clean_singletons (undefined helpers) and the
    #             data-dependent per-domain confidence loop have no clean
    #             Pallas equivalent and are not implemented here.
    return feat, masks


# --------------------------------------------------------------------------- #
# Parameter initialisation
# --------------------------------------------------------------------------- #
def init_block_params(key, dim, mlp_dim):
    ks = jax.random.split(key, 10)
    s = 0.05
    return {
        "ln1_g": 1.0 + s * jax.random.normal(ks[8], (1, dim), jnp.float32),
        "ln1_b": s * jax.random.normal(ks[9], (1, dim), jnp.float32),
        "ln2_g": jnp.ones((1, dim), jnp.float32),
        "ln2_b": jnp.zeros((1, dim), jnp.float32),
        # stored as (in, out):  y = x @ W + b
        "wqkv": jax.random.normal(ks[0], (dim, 3 * dim), jnp.float32) * s,
        "bqkv": jax.random.normal(ks[1], (1, 3 * dim), jnp.float32) * s,
        "wproj": jax.random.normal(ks[2], (dim, dim), jnp.float32) * s,
        "bproj": jax.random.normal(ks[3], (1, dim), jnp.float32) * s,
        "w1": jax.random.normal(ks[4], (dim, mlp_dim), jnp.float32) * s,
        "b1": jax.random.normal(ks[5], (1, mlp_dim), jnp.float32) * s,
        "w2": jax.random.normal(ks[6], (mlp_dim, dim), jnp.float32) * s,
        "b2": jax.random.normal(ks[7], (1, dim), jnp.float32) * s,
    }


def init_mask_transformer_params(key, d_model, d_ff, n_layers, n_cls):
    keys = jax.random.split(key, n_layers + 1)
    blocks = [init_block_params(keys[i], d_model, d_ff) for i in range(n_layers)]
    kh = jax.random.split(keys[-1], 3)
    scale = d_model ** (-0.5)
    return {
        "blocks": blocks,
        "cls_emb": jax.random.normal(kh[0], (1, n_cls, d_model), jnp.float32),
        "proj_patch": scale * jax.random.normal(kh[1], (d_model, d_model), jnp.float32),
        "proj_classes": scale * jax.random.normal(kh[2], (d_model, d_model), jnp.float32),
        "dn_g": jnp.ones((1, d_model), jnp.float32),
        "dn_b": jnp.zeros((1, d_model), jnp.float32),
        "cn_g": jnp.ones((1, n_cls), jnp.float32),
        "cn_b": jnp.zeros((1, n_cls), jnp.float32),
    }


# --------------------------------------------------------------------------- #
# Pure-JAX references
# --------------------------------------------------------------------------- #
def _ref_mm(a, b, mxu_dtype):
    return jnp.dot(a.astype(mxu_dtype), b.astype(mxu_dtype),
                   preferred_element_type=jnp.float32)


def _ref_ln(v, g, b, eps=1e-5):
    mu = jnp.mean(v, axis=-1, keepdims=True)
    var = jnp.mean((v - mu) ** 2, axis=-1, keepdims=True)
    return (v - mu) / jnp.sqrt(var + eps) * g + b


def block_reference(x, params, heads, mxu_dtype=jnp.float32):
    """mxu_dtype=f32 -> exact module semantics; bf16 -> kernel quantisation."""
    B, N, C = x.shape
    hd = C // heads
    f32 = jnp.float32

    h = _ref_ln(x, params["ln1_g"], params["ln1_b"])
    qkv = _ref_mm(h, params["wqkv"], mxu_dtype) + params["bqkv"]
    qkv = qkv.astype(mxu_dtype).astype(f32)
    qkv = qkv.reshape(B, N, 3, heads, hd).transpose(2, 0, 3, 1, 4)
    q, k, v = qkv[0], qkv[1], qkv[2]
    s = jnp.einsum("bhqd,bhkd->bhqk", q.astype(mxu_dtype), k.astype(mxu_dtype),
                   preferred_element_type=f32)
    attn = jax.nn.softmax(s, axis=-1)
    o = jnp.einsum("bhqk,bhkd->bhqd", attn.astype(mxu_dtype),
                   v.astype(mxu_dtype), preferred_element_type=f32)
    o = o.transpose(0, 2, 1, 3).reshape(B, N, C)
    x1 = x + _ref_mm(o, params["wproj"], mxu_dtype) + params["bproj"]
    h2 = _ref_ln(x1, params["ln2_g"], params["ln2_b"])
    f = _ref_mm(h2, params["w1"], mxu_dtype) + params["b1"]
    f = 0.5 * f * (1.0 + lax.erf(f * 0.7071067811865476))
    f = _ref_mm(f, params["w2"], mxu_dtype) + params["b2"]
    return x1 + f


def mask_transformer_reference(s, params, heads, mxu_dtype=jnp.float32):
    B, Np, C = s.shape
    n_cls = params["cls_emb"].shape[1]
    cls_emb = jnp.broadcast_to(params["cls_emb"], (B, n_cls, C))
    x = jnp.concatenate([s, cls_emb], axis=1)
    for bp in params["blocks"]:
        x = block_reference(x, bp, heads, mxu_dtype)
    xn = _ref_ln(x, params["dn_g"], params["dn_b"])
    feat = _ref_mm(xn[:, :-n_cls], params["proj_patch"], mxu_dtype)
    clsf = _ref_mm(xn[:, -n_cls:], params["proj_classes"], mxu_dtype)
    feat = feat / jnp.sqrt(jnp.sum(feat * feat, axis=-1, keepdims=True))
    clsf = clsf / jnp.sqrt(jnp.sum(clsf * clsf, axis=-1, keepdims=True))
    dm = jnp.einsum("bnc,bkc->bnk", feat.astype(mxu_dtype), clsf.astype(mxu_dtype),
                    preferred_element_type=jnp.float32)
    dm = _ref_ln(dm, params["cn_g"], params["cn_b"])
    return feat, dm


# --------------------------------------------------------------------------- #
if __name__ == "__main__":
    # Small but lane-aligned config (d_model multiple of 128; Np, Np+n_cls
    # multiples of 8).
    B, Np, d_model, heads, d_ff, n_cls, n_layers = 2, 16, 128, 4, 256, 8, 2
    key = jax.random.PRNGKey(0)
    ks, kp = jax.random.split(key)
    s = jax.random.normal(ks, (B, Np, d_model), jnp.float32)
    params = init_mask_transformer_params(kp, d_model, d_ff, n_layers, n_cls)

    # --- 1) single Block layer: tight check vs bf16-consistent reference and
    #        a looser check vs exact f32 module semantics ---------------------
    cls_emb = jnp.broadcast_to(params["cls_emb"], (B, n_cls, d_model))
    x0 = jnp.concatenate([s, cls_emb], axis=1)                 # (B, Np+n_cls, C)
    blk_out = jax.block_until_ready(block_forward(x0, params["blocks"][0], heads))
    assert blk_out.shape == x0.shape
    ref_b_bf16 = block_reference(x0, params["blocks"][0], heads, jnp.bfloat16)
    assert jnp.allclose(blk_out, ref_b_bf16, atol=1e-2, rtol=1e-2), \
        float(jnp.max(jnp.abs(blk_out - ref_b_bf16)))
    ref_b_f32 = block_reference(x0, params["blocks"][0], heads, jnp.float32)
    assert jnp.allclose(blk_out, ref_b_f32, atol=6e-2, rtol=6e-2), \
        float(jnp.max(jnp.abs(blk_out - ref_b_f32)))

    # --- 2) full trunk + decoder head vs bf16-consistent reference -----------
    feat, masks = jax.block_until_ready(mask_transformer_forward(s, params, heads))
    assert feat.shape == (B, Np, d_model)
    assert masks.shape == (B, Np, n_cls)
    rfeat, rmasks = mask_transformer_reference(s, params, heads, jnp.bfloat16)
    assert jnp.allclose(feat, rfeat, atol=5e-2, rtol=5e-2), \
        float(jnp.max(jnp.abs(feat - rfeat)))
    assert jnp.allclose(masks, rmasks, atol=1e-1, rtol=1e-1), \
        float(jnp.max(jnp.abs(masks - rmasks)))

    print("KERNEL_OK")
</pallas_src>

<mosaic_0001>
module attributes {stable_mosaic.version = 11 : i64} {
  func.func @block_kernel(%arg0: i32, %arg1: i32, %arg2: memref<1x24x128xf32, #tpu.memory_space<vmem>>, %arg3: memref<1x128xf32, #tpu.memory_space<vmem>>, %arg4: memref<1x128xf32, #tpu.memory_space<vmem>>, %arg5: memref<1x128xf32, #tpu.memory_space<vmem>>, %arg6: memref<1x128xf32, #tpu.memory_space<vmem>>, %arg7: memref<128x384xbf16, #tpu.memory_space<vmem>>, %arg8: memref<1x384xf32, #tpu.memory_space<vmem>>, %arg9: memref<1x32x128xbf16, #tpu.memory_space<vmem>>, %arg10: memref<1x128xf32, #tpu.memory_space<vmem>>, %arg11: memref<128x256xbf16, #tpu.memory_space<vmem>>, %arg12: memref<1x256xf32, #tpu.memory_space<vmem>>, %arg13: memref<256x128xbf16, #tpu.memory_space<vmem>>, %arg14: memref<1x128xf32, #tpu.memory_space<vmem>>, %arg15: memref<1x24x128xf32, #tpu.memory_space<vmem>>, %arg16: memref<12x24x32xbf16, #tpu.memory_space<vmem>>, %arg17: memref<24x128xf32, #tpu.memory_space<vmem>>) attributes {dimension_semantics = [#tpu.dimension_semantics<parallel>, #tpu.dimension_semantics<arbitrary>], iteration_bounds = array<i64: 2, 4>, scalar_prefetch = 0 : i64, scratch_operands = 2 : i64, tpu.core_type = #tpu.core_type<tc>, window_params = [{transform_indices = @transform_0, window_bounds = array<i64: 1, 24, 128>}, {pipeline_mode = #tpu.pipeline_mode<synchronous>, transform_indices = @transform_1, window_bounds = array<i64: 1, 128>}, {pipeline_mode = #tpu.pipeline_mode<synchronous>, transform_indices = @transform_2, window_bounds = array<i64: 1, 128>}, {pipeline_mode = #tpu.pipeline_mode<synchronous>, transform_indices = @transform_3, window_bounds = array<i64: 1, 128>}, {pipeline_mode = #tpu.pipeline_mode<synchronous>, transform_indices = @transform_4, window_bounds = array<i64: 1, 128>}, {pipeline_mode = #tpu.pipeline_mode<synchronous>, transform_indices = @transform_5, window_bounds = array<i64: 128, 384>}, {pipeline_mode = #tpu.pipeline_mode<synchronous>, transform_indices = @transform_6, window_bounds = array<i64: 1, 384>}, {transform_indices = @transform_7, window_bounds = array<i64: 1, 32, 128>}, {pipeline_mode = #tpu.pipeline_mode<synchronous>, transform_indices = @transform_8, window_bounds = array<i64: 1, 128>}, {pipeline_mode = #tpu.pipeline_mode<synchronous>, transform_indices = @transform_9, window_bounds = array<i64: 128, 256>}, {pipeline_mode = #tpu.pipeline_mode<synchronous>, transform_indices = @transform_10, window_bounds = array<i64: 1, 256>}, {pipeline_mode = #tpu.pipeline_mode<synchronous>, transform_indices = @transform_11, window_bounds = array<i64: 256, 128>}, {pipeline_mode = #tpu.pipeline_mode<synchronous>, transform_indices = @transform_12, window_bounds = array<i64: 1, 128>}, {transform_indices = @transform_13, window_bounds = array<i64: 1, 24, 128>}]} {
    %c0_i32 = arith.constant 0 : i32
    %0 = arith.cmpi eq, %arg1, %c0_i32 : i32
    %1 = arith.extui %0 : i1 to i32
    %c0_i32_0 = arith.constant 0 : i32
    %2 = arith.cmpi ne, %1, %c0_i32_0 : i32
    scf.if %2 {
      %c0_19 = arith.constant 0 : index
      %c0_20 = arith.constant 0 : index
      %c0_21 = arith.constant 0 : index
      %38 = vector.load %arg2[%c0_19, %c0_20, %c0_21] : memref<1x24x128xf32, #tpu.memory_space<vmem>>, vector<1x24x128xf32>
      %39 = vector.shape_cast %38 : vector<1x24x128xf32> to vector<24x128xf32>
      %c0_22 = arith.constant 0 : index
      %c0_23 = arith.constant 0 : index
      %40 = vector.load %arg3[%c0_22, %c0_23] : memref<1x128xf32, #tpu.memory_space<vmem>>, vector<1x128xf32>
      %c0_24 = arith.constant 0 : index
      %c0_25 = arith.constant 0 : index
      %41 = vector.load %arg4[%c0_24, %c0_25] : memref<1x128xf32, #tpu.memory_space<vmem>>, vector<1x128xf32>
      %cst_26 = arith.constant dense<0.000000e+00> : vector<24xf32>
      %42 = vector.multi_reduction <add>, %39, %cst_26 [1] : vector<24x128xf32> to vector<24xf32>
      %43 = vector.shape_cast %42 : vector<24xf32> to vector<24x1xf32>
      %cst_27 = arith.constant 1.280000e+02 : f32
      %44 = vector.broadcast %cst_27 : f32 to vector<24x1xf32>
      %45 = arith.divf %43, %44 : vector<24x1xf32>
      %46 = vector.broadcast %45 : vector<24x1xf32> to vector<24x128xf32>
      %47 = arith.subf %39, %46 : vector<24x128xf32>
      %48 = arith.mulf %47, %47 : vector<24x128xf32>
      %cst_28 = arith.constant dense<0.000000e+00> : vector<24xf32>
      %49 = vector.multi_reduction <add>, %48, %cst_28 [1] : vector<24x128xf32> to vector<24xf32>
      %50 = vector.shape_cast %49 : vector<24xf32> to vector<24x1xf32>
      %cst_29 = arith.constant 1.280000e+02 : f32
      %51 = vector.broadcast %cst_29 : f32 to vector<24x1xf32>
      %52 = arith.divf %50, %51 : vector<24x1xf32>
      %53 = vector.broadcast %45 : vector<24x1xf32> to vector<24x128xf32>
      %54 = arith.subf %39, %53 : vector<24x128xf32>
      %cst_30 = arith.constant 9.99999974E-6 : f32
      %55 = vector.broadcast %cst_30 : f32 to vector<24x1xf32>
      %56 = arith.addf %52, %55 : vector<24x1xf32>
      %57 = math.rsqrt %56 : vector<24x1xf32>
      %58 = vector.broadcast %57 : vector<24x1xf32> to vector<24x128xf32>
      %59 = arith.mulf %54, %58 : vector<24x128xf32>
      %60 = vector.broadcast %40 : vector<1x128xf32> to vector<24x128xf32>
      %61 = arith.mulf %59, %60 : vector<24x128xf32>
      %62 = vector.broadcast %41 : vector<1x128xf32> to vector<24x128xf32>
      %63 = arith.addf %61, %62 : vector<24x128xf32>
      %64 = arith.truncf %63 : vector<24x128xf32> to vector<24x128xbf16>
      %c0_31 = arith.constant 0 : index
      %c0_32 = arith.constant 0 : index
      %65 = vector.load %arg7[%c0_31, %c0_32] : memref<128x384xbf16, #tpu.memory_space<vmem>>, vector<128x384xbf16>
      %cst_33 = arith.constant dense<0.000000e+00> : vector<24x384xf32>
      %66 = tpu.matmul %64, %65, %cst_33 {dimension_numbers = #tpu.dot_dimension_numbers<[1], [0], [0], [1], [0, 0, 1, 1], [], []>} : vector<24x128xbf16>, vector<128x384xbf16>, vector<24x384xf32> -> vector<24x384xf32>
      %c0_34 = arith.constant 0 : index
      %c0_35 = arith.constant 0 : index
      %67 = vector.load %arg8[%c0_34, %c0_35] : memref<1x384xf32, #tpu.memory_space<vmem>>, vector<1x384xf32>
      %68 = vector.broadcast %67 : vector<1x384xf32> to vector<24x384xf32>
      %69 = arith.addf %66, %68 : vector<24x384xf32>
      %70 = arith.truncf %69 : vector<24x384xf32> to vector<24x384xbf16>
      %71 = vector.extract_strided_slice %70 {offsets = [0, 0], sizes = [24, 32], strides = [1, 1]} : vector<24x384xbf16> to vector<24x32xbf16>
      %c0_36 = arith.constant 0 : index
      %c0_37 = arith.constant 0 : index
      %c0_38 = arith.constant 0 : index
      %72 = vector.load %arg16[%c0_36, %c0_37, %c0_38] : memref<12x24x32xbf16, #tpu.memory_space<vmem>>, vector<1x24x32xbf16>
      %73 = vector.shape_cast %72 : vector<1x24x32xbf16> to vector<24x32xbf16>
      %74 = vector.shape_cast %71 : vector<24x32xbf16> to vector<1x24x32xbf16>
      tpu.vector_store %arg16[%c0_36, %c0_37, %c0_38], %74 {strides = array<i32>} : memref<12x24x32xbf16, #tpu.memory_space<vmem>>, vector<1x24x32xbf16>,
      %75 = vector.extract_strided_slice %70 {offsets = [0, 128], sizes = [24, 32], strides = [1, 1]} : vector<24x384xbf16> to vector<24x32xbf16>
      %c1 = arith.constant 1 : index
      %c0_39 = arith.constant 0 : index
      %c0_40 = arith.constant 0 : index
      %76 = vector.load %arg16[%c1, %c0_39, %c0_40] : memref<12x24x32xbf16, #tpu.memory_space<vmem>>, vector<1x24x32xbf16>
      %77 = vector.shape_cast %76 : vector<1x24x32xbf16> to vector<24x32xbf16>
      %78 = vector.shape_cast %75 : vector<24x32xbf16> to vector<1x24x32xbf16>
      tpu.vector_store %arg16[%c1, %c0_39, %c0_40], %78 {strides = array<i32>} : memref<12x24x32xbf16, #tpu.memory_space<vmem>>, vector<1x24x32xbf16>,
      %79 = vector.extract_strided_slice %70 {offsets = [0, 256], sizes = [24, 32], strides = [1, 1]} : vector<24x384xbf16> to vector<24x32xbf16>
      %c2 = arith.constant 2 : index
      %c0_41 = arith.constant 0 : index
      %c0_42 = arith.constant 0 : index
      %80 = vector.load %arg16[%c2, %c0_41, %c0_42] : memref<12x24x32xbf16, #tpu.memory_space<vmem>>, vector<1x24x32xbf16>
      %81 = vector.shape_cast %80 : vector<1x24x32xbf16> to vector<24x32xbf16>
      %82 = vector.shape_cast %79 : vector<24x32xbf16> to vector<1x24x32xbf16>
      tpu.vector_store %arg16[%c2, %c0_41, %c0_42], %82 {strides = array<i32>} : memref<12x24x32xbf16, #tpu.memory_space<vmem>>, vector<1x24x32xbf16>,
      %83 = vector.extract_strided_slice %70 {offsets = [0, 32], sizes = [24, 32], strides = [1, 1]} : vector<24x384xbf16> to vector<24x32xbf16>
      %c3 = arith.constant 3 : index
      %c0_43 = arith.constant 0 : index
      %c0_44 = arith.constant 0 : index
      %84 = vector.load %arg16[%c3, %c0_43, %c0_44] : memref<12x24x32xbf16, #tpu.memory_space<vmem>>, vector<1x24x32xbf16>
      %85 = vector.shape_cast %84 : vector<1x24x32xbf16> to vector<24x32xbf16>
      %86 = vector.shape_cast %83 : vector<24x32xbf16> to vector<1x24x32xbf16>
      tpu.vector_store %arg16[%c3, %c0_43, %c0_44], %86 {strides = array<i32>} : memref<12x24x32xbf16, #tpu.memory_space<vmem>>, vector<1x24x32xbf16>,
      %87 = vector.extract_strided_slice %70 {offsets = [0, 160], sizes = [24, 32], strides = [1, 1]} : vector<24x384xbf16> to vector<24x32xbf16>
      %c4 = arith.constant 4 : index
      %c0_45 = arith.constant 0 : index
      %c0_46 = arith.constant 0 : index
      %88 = vector.load %arg16[%c4, %c0_45, %c0_46] : memref<12x24x32xbf16, #tpu.memory_space<vmem>>, vector<1x24x32xbf16>
      %89 = vector.shape_cast %88 : vector<1x24x32xbf16> to vector<24x32xbf16>
      %90 = vector.shape_cast %87 : vector<24x32xbf16> to vector<1x24x32xbf16>
      tpu.vector_store %arg16[%c4, %c0_45, %c0_46], %90 {strides = array<i32>} : memref<12x24x32xbf16, #tpu.memory_space<vmem>>, vector<1x24x32xbf16>,
      %91 = vector.extract_strided_slice %70 {offsets = [0, 288], sizes = [24, 32], strides = [1, 1]} : vector<24x384xbf16> to vector<24x32xbf16>
      %c5 = arith.constant 5 : index
      %c0_47 = arith.constant 0 : index
      %c0_48 = arith.constant 0 : index
      %92 = vector.load %arg16[%c5, %c0_47, %c0_48] : memref<12x24x32xbf16, #tpu.memory_space<vmem>>, vector<1x24x32xbf16>
      %93 = vector.shape_cast %92 : vector<1x24x32xbf16> to vector<24x32xbf16>
      %94 = vector.shape_cast %91 : vector<24x32xbf16> to vector<1x24x32xbf16>
      tpu.vector_store %arg16[%c5, %c0_47, %c0_48], %94 {strides = array<i32>} : memref<12x24x32xbf16, #tpu.memory_space<vmem>>, vector<1x24x32xbf16>,
      %95 = vector.extract_strided_slice %70 {offsets = [0, 64], sizes = [24, 32], strides = [1, 1]} : vector<24x384xbf16> to vector<24x32xbf16>
      %c6 = arith.constant 6 : index
      %c0_49 = arith.constant 0 : index
      %c0_50 = arith.constant 0 : index
      %96 = vector.load %arg16[%c6, %c0_49, %c0_50] : memref<12x24x32xbf16, #tpu.memory_space<vmem>>, vector<1x24x32xbf16>
      %97 = vector.shape_cast %96 : vector<1x24x32xbf16> to vector<24x32xbf16>
      %98 = vector.shape_cast %95 : vector<24x32xbf16> to vector<1x24x32xbf16>
      tpu.vector_store %arg16[%c6, %c0_49, %c0_50], %98 {strides = array<i32>} : memref<12x24x32xbf16, #tpu.memory_space<vmem>>, vector<1x24x32xbf16>,
      %99 = vector.extract_strided_slice %70 {offsets = [0, 192], sizes = [24, 32], strides = [1, 1]} : vector<24x384xbf16> to vector<24x32xbf16>
      %c7 = arith.constant 7 : index
      %c0_51 = arith.constant 0 : index
      %c0_52 = arith.constant 0 : index
      %100 = vector.load %arg16[%c7, %c0_51, %c0_52] : memref<12x24x32xbf16, #tpu.memory_space<vmem>>, vector<1x24x32xbf16>
      %101 = vector.shape_cast %100 : vector<1x24x32xbf16> to vector<24x32xbf16>
      %102 = vector.shape_cast %99 : vector<24x32xbf16> to vector<1x24x32xbf16>
      tpu.vector_store %arg16[%c7, %c0_51, %c0_52], %102 {strides = array<i32>} : memref<12x24x32xbf16, #tpu.memory_space<vmem>>, vector<1x24x32xbf16>,
      %103 = vector.extract_strided_slice %70 {offsets = [0, 320], sizes = [24, 32], strides = [1, 1]} : vector<24x384xbf16> to vector<24x32xbf16>
      %c8 = arith.constant 8 : index
      %c0_53 = arith.constant 0 : index
      %c0_54 = arith.constant 0 : index
      %104 = vector.load %arg16[%c8, %c0_53, %c0_54] : memref<12x24x32xbf16, #tpu.memory_space<vmem>>, vector<1x24x32xbf16>
      %105 = vector.shape_cast %104 : vector<1x24x32xbf16> to vector<24x32xbf16>
      %106 = vector.shape_cast %103 : vector<24x32xbf16> to vector<1x24x32xbf16>
      tpu.vector_store %arg16[%c8, %c0_53, %c0_54], %106 {strides = array<i32>} : memref<12x24x32xbf16, #tpu.memory_space<vmem>>, vector<1x24x32xbf16>,
      %107 = vector.extract_strided_slice %70 {offsets = [0, 96], sizes = [24, 32], strides = [1, 1]} : vector<24x384xbf16> to vector<24x32xbf16>
      %c9 = arith.constant 9 : index
      %c0_55 = arith.constant 0 : index
      %c0_56 = arith.constant 0 : index
      %108 = vector.load %arg16[%c9, %c0_55, %c0_56] : memref<12x24x32xbf16, #tpu.memory_space<vmem>>, vector<1x24x32xbf16>
      %109 = vector.shape_cast %108 : vector<1x24x32xbf16> to vector<24x32xbf16>
      %110 = vector.shape_cast %107 : vector<24x32xbf16> to vector<1x24x32xbf16>
      tpu.vector_store %arg16[%c9, %c0_55, %c0_56], %110 {strides = array<i32>} : memref<12x24x32xbf16, #tpu.memory_space<vmem>>, vector<1x24x32xbf16>,
      %111 = vector.extract_strided_slice %70 {offsets = [0, 224], sizes = [24, 32], strides = [1, 1]} : vector<24x384xbf16> to vector<24x32xbf16>
      %c10 = arith.constant 10 : index
      %c0_57 = arith.constant 0 : index
      %c0_58 = arith.constant 0 : index
      %112 = vector.load %arg16[%c10, %c0_57, %c0_58] : memref<12x24x32xbf16, #tpu.memory_space<vmem>>, vector<1x24x32xbf16>
      %113 = vector.shape_cast %112 : vector<1x24x32xbf16> to vector<24x32xbf16>
      %114 = vector.shape_cast %111 : vector<24x32xbf16> to vector<1x24x32xbf16>
      tpu.vector_store %arg16[%c10, %c0_57, %c0_58], %114 {strides = array<i32>} : memref<12x24x32xbf16, #tpu.memory_space<vmem>>, vector<1x24x32xbf16>,
      %115 = vector.extract_strided_slice %70 {offsets = [0, 352], sizes = [24, 32], strides = [1, 1]} : vector<24x384xbf16> to vector<24x32xbf16>
      %c11 = arith.constant 11 : index
      %c0_59 = arith.constant 0 : index
      %c0_60 = arith.constant 0 : index
      %116 = vector.load %arg16[%c11, %c0_59, %c0_60] : memref<12x24x32xbf16, #tpu.memory_space<vmem>>, vector<1x24x32xbf16>
      %117 = vector.shape_cast %116 : vector<1x24x32xbf16> to vector<24x32xbf16>
      %118 = vector.shape_cast %115 : vector<24x32xbf16> to vector<1x24x32xbf16>
      tpu.vector_store %arg16[%c11, %c0_59, %c0_60], %118 {strides = array<i32>} : memref<12x24x32xbf16, #tpu.memory_space<vmem>>, vector<1x24x32xbf16>,
      %cst_61 = arith.constant 0.000000e+00 : f32
      %119 = vector.broadcast %cst_61 : f32 to vector<24x128xf32>
      %c0_62 = arith.constant 0 : index
      %c0_63 = arith.constant 0 : index
      %120 = vector.load %arg17[%c0_62, %c0_63] : memref<24x128xf32, #tpu.memory_space<vmem>>, vector<24x128xf32>
      tpu.vector_store %arg17[%c0_62, %c0_63], %119 {strides = array<i32>} : memref<24x128xf32, #tpu.memory_space<vmem>>, vector<24x128xf32>,
    } else {
    }
    %c3_i32 = arith.constant 3 : i32
    %3 = arith.muli %c3_i32, %arg1 : i32
    %4 = arith.index_cast %3 : i32 to index
    %c0 = arith.constant 0 : index
    %c0_1 = arith.constant 0 : index
    %5 = vector.load %arg16[%4, %c0, %c0_1] : memref<12x24x32xbf16, #tpu.memory_space<vmem>>, vector<1x24x32xbf16>
    %6 = vector.shape_cast %5 : vector<1x24x32xbf16> to vector<24x32xbf16>
    %c1_i32 = arith.constant 1 : i32
    %7 = arith.addi %3, %c1_i32 : i32
    %8 = arith.index_cast %7 : i32 to index
    %c0_2 = arith.constant 0 : index
    %c0_3 = arith.constant 0 : index
    %9 = vector.load %arg16[%8, %c0_2, %c0_3] : memref<12x24x32xbf16, #tpu.memory_space<vmem>>, vector<1x24x32xbf16>
    %10 = vector.shape_cast %9 : vector<1x24x32xbf16> to vector<24x32xbf16>
    %c2_i32 = arith.constant 2 : i32
    %11 = arith.addi %3, %c2_i32 : i32
    %12 = arith.index_cast %11 : i32 to index
    %c0_4 = arith.constant 0 : index
    %c0_5 = arith.constant 0 : index
    %13 = vector.load %arg16[%12, %c0_4, %c0_5] : memref<12x24x32xbf16, #tpu.memory_space<vmem>>, vector<1x24x32xbf16>
    %14 = vector.shape_cast %13 : vector<1x24x32xbf16> to vector<24x32xbf16>
    %cst = arith.constant dense<0.000000e+00> : vector<24x24xf32>
    %15 = tpu.matmul %6, %10, %cst {dimension_numbers = #tpu.dot_dimension_numbers<[1], [1], [0], [0], [0, 0, 1, 0], [], []>} : vector<24x32xbf16>, vector<24x32xbf16>, vector<24x24xf32> -> vector<24x24xf32>
    %cst_6 = arith.constant dense<0xFF800000> : vector<24xf32>
    %16 = vector.multi_reduction <maximumf>, %15, %cst_6 [1] : vector<24x24xf32> to vector<24xf32>
    %17 = vector.shape_cast %16 : vector<24xf32> to vector<24x1xf32>
    %18 = vector.broadcast %17 : vector<24x1xf32> to vector<24x24xf32>
    %19 = arith.subf %15, %18 : vector<24x24xf32>
    %20 = math.exp %19 : vector<24x24xf32>
    %cst_7 = arith.constant dense<0.000000e+00> : vector<24xf32>
    %21 = vector.multi_reduction <add>, %20, %cst_7 [1] : vector<24x24xf32> to vector<24xf32>
    %22 = vector.shape_cast %21 : vector<24xf32> to vector<24x1xf32>
    %23 = tpu.reciprocal %22 {approx = true} : vector<24x1xf32> -> vector<24x1xf32>
    %24 = vector.broadcast %23 : vector<24x1xf32> to vector<24x24xf32>
    %25 = arith.mulf %20, %24 : vector<24x24xf32>
    %26 = arith.truncf %25 : vector<24x24xf32> to vector<24x24xbf16>
    %cst_8 = arith.constant dense<0.000000e+00> : vector<24x32xf32>
    %27 = tpu.matmul %26, %14, %cst_8 {dimension_numbers = #tpu.dot_dimension_numbers<[1], [0], [0], [1], [0, 0, 1, 1], [], []>} : vector<24x24xbf16>, vector<24x32xbf16>, vector<24x32xf32> -> vector<24x32xf32>
    %c0_9 = arith.constant 0 : index
    %c0_10 = arith.constant 0 : index
    %28 = vector.load %arg17[%c0_9, %c0_10] : memref<24x128xf32, #tpu.memory_space<vmem>>, vector<24x128xf32>
    %29 = arith.truncf %27 : vector<24x32xf32> to vector<24x32xbf16>
    %c0_11 = arith.constant 0 : index
    %c0_12 = arith.constant 0 : index
    %c0_13 = arith.constant 0 : index
    %30 = vector.load %arg9[%c0_11, %c0_12, %c0_13] : memref<1x32x128xbf16, #tpu.memory_space<vmem>>, vector<1x32x128xbf16>
    %31 = vector.shape_cast %30 : vector<1x32x128xbf16> to vector<32x128xbf16>
    %cst_14 = arith.constant dense<0.000000e+00> : vector<24x128xf32>
    %32 = tpu.matmul %29, %31, %cst_14 {dimension_numbers = #tpu.dot_dimension_numbers<[1], [0], [0], [1], [0, 0, 1, 1], [], []>} : vector<24x32xbf16>, vector<32x128xbf16>, vector<24x128xf32> -> vector<24x128xf32>
    %33 = arith.addf %28, %32 : vector<24x128xf32>
    %c0_15 = arith.constant 0 : index
    %c0_16 = arith.constant 0 : index
    %34 = vector.load %arg17[%c0_15, %c0_16] : memref<24x128xf32, #tpu.memory_space<vmem>>, vector<24x128xf32>
    tpu.vector_store %arg17[%c0_15, %c0_16], %33 {strides = array<i32>} : memref<24x128xf32, #tpu.memory_space<vmem>>, vector<24x128xf32>,
    %c3_i32_17 = arith.constant 3 : i32
    %35 = arith.cmpi eq, %arg1, %c3_i32_17 : i32
    %36 = arith.extui %35 : i1 to i32
    %c0_i32_18 = arith.constant 0 : i32
    %37 = arith.cmpi ne, %36, %c0_i32_18 : i32
    scf.if %37 {
      %c0_19 = arith.constant 0 : index
      %c0_20 = arith.constant 0 : index
      %c0_21 = arith.constant 0 : index
      %38 = vector.load %arg2[%c0_19, %c0_20, %c0_21] : memref<1x24x128xf32, #tpu.memory_space<vmem>>, vector<1x24x128xf32>
      %39 = vector.shape_cast %38 : vector<1x24x128xf32> to vector<24x128xf32>
      %c0_22 = arith.constant 0 : index
      %c0_23 = arith.constant 0 : index
      %40 = vector.load %arg17[%c0_22, %c0_23] : memref<24x128xf32, #tpu.memory_space<vmem>>, vector<24x128xf32>
      %41 = arith.addf %39, %40 : vector<24x128xf32>
      %c0_24 = arith.constant 0 : index
      %c0_25 = arith.constant 0 : index
      %42 = vector.load %arg10[%c0_24, %c0_25] : memref<1x128xf32, #tpu.memory_space<vmem>>, vector<1x128xf32>
      %43 = vector.broadcast %42 : vector<1x128xf32> to vector<24x128xf32>
      %44 = arith.addf %41, %43 : vector<24x128xf32>
      %c0_26 = arith.constant 0 : index
      %c0_27 = arith.constant 0 : index
      %45 = vector.load %arg5[%c0_26, %c0_27] : memref<1x128xf32, #tpu.memory_space<vmem>>, vector<1x128xf32>
      %c0_28 = arith.constant 0 : index
      %c0_29 = arith.constant 0 : index
      %46 = vector.load %arg6[%c0_28, %c0_29] : memref<1x128xf32, #tpu.memory_space<vmem>>, vector<1x128xf32>
      %cst_30 = arith.constant dense<0.000000e+00> : vector<24xf32>
      %47 = vector.multi_reduction <add>, %44, %cst_30 [1] : vector<24x128xf32> to vector<24xf32>
      %48 = vector.shape_cast %47 : vector<24xf32> to vector<24x1xf32>
      %cst_31 = arith.constant 1.280000e+02 : f32
      %49 = vector.broadcast %cst_31 : f32 to vector<24x1xf32>
      %50 = arith.divf %48, %49 : vector<24x1xf32>
      %51 = vector.broadcast %50 : vector<24x1xf32> to vector<24x128xf32>
      %52 = arith.subf %44, %51 : vector<24x128xf32>
      %53 = arith.mulf %52, %52 : vector<24x128xf32>
      %cst_32 = arith.constant dense<0.000000e+00> : vector<24xf32>
      %54 = vector.multi_reduction <add>, %53, %cst_32 [1] : vector<24x128xf32> to vector<24xf32>
      %55 = vector.shape_cast %54 : vector<24xf32> to vector<24x1xf32>
      %cst_33 = arith.constant 1.280000e+02 : f32
      %56 = vector.broadcast %cst_33 : f32 to vector<24x1xf32>
      %57 = arith.divf %55, %56 : vector<24x1xf32>
      %58 = vector.broadcast %50 : vector<24x1xf32> to vector<24x128xf32>
      %59 = arith.subf %44, %58 : vector<24x128xf32>
      %cst_34 = arith.constant 9.99999974E-6 : f32
      %60 = vector.broadcast %cst_34 : f32 to vector<24x1xf32>
      %61 = arith.addf %57, %60 : vector<24x1xf32>
      %62 = math.rsqrt %61 : vector<24x1xf32>
      %63 = vector.broadcast %62 : vector<24x1xf32> to vector<24x128xf32>
      %64 = arith.mulf %59, %63 : vector<24x128xf32>
      %65 = vector.broadcast %45 : vector<1x128xf32> to vector<24x128xf32>
      %66 = arith.mulf %64, %65 : vector<24x128xf32>
      %67 = vector.broadcast %46 : vector<1x128xf32> to vector<24x128xf32>
      %68 = arith.addf %66, %67 : vector<24x128xf32>
      %69 = arith.truncf %68 : vector<24x128xf32> to vector<24x128xbf16>
      %c0_35 = arith.constant 0 : index
      %c0_36 = arith.constant 0 : index
      %70 = vector.load %arg11[%c0_35, %c0_36] : memref<128x256xbf16, #tpu.memory_space<vmem>>, vector<128x256xbf16>
      %cst_37 = arith.constant dense<0.000000e+00> : vector<24x256xf32>
      %71 = tpu.matmul %69, %70, %cst_37 {dimension_numbers = #tpu.dot_dimension_numbers<[1], [0], [0], [1], [0, 0, 1, 1], [], []>} : vector<24x128xbf16>, vector<128x256xbf16>, vector<24x256xf32> -> vector<24x256xf32>
      %c0_38 = arith.constant 0 : index
      %c0_39 = arith.constant 0 : index
      %72 = vector.load %arg12[%c0_38, %c0_39] : memref<1x256xf32, #tpu.memory_space<vmem>>, vector<1x256xf32>
      %73 = vector.broadcast %72 : vector<1x256xf32> to vector<24x256xf32>
      %74 = arith.addf %71, %73 : vector<24x256xf32>
      %cst_40 = arith.constant 5.000000e-01 : f32
      %75 = vector.broadcast %cst_40 : f32 to vector<24x256xf32>
      %76 = arith.mulf %75, %74 : vector<24x256xf32>
      %cst_41 = arith.constant 0.707106769 : f32
      %77 = vector.broadcast %cst_41 : f32 to vector<24x256xf32>
      %78 = arith.mulf %74, %77 : vector<24x256xf32>
      %79 = math.erf %78 : vector<24x256xf32>
      %cst_42 = arith.constant 1.000000e+00 : f32
      %80 = vector.broadcast %cst_42 : f32 to vector<24x256xf32>
      %81 = arith.addf %80, %79 : vector<24x256xf32>
      %82 = arith.mulf %76, %81 : vector<24x256xf32>
      %83 = arith.truncf %82 : vector<24x256xf32> to vector<24x256xbf16>
      %c0_43 = arith.constant 0 : index
      %c0_44 = arith.constant 0 : index
      %84 = vector.load %arg13[%c0_43, %c0_44] : memref<256x128xbf16, #tpu.memory_space<vmem>>, vector<256x128xbf16>
      %cst_45 = arith.constant dense<0.000000e+00> : vector<24x128xf32>
      %85 = tpu.matmul %83, %84, %cst_45 {dimension_numbers = #tpu.dot_dimension_numbers<[1], [0], [0], [1], [0, 0, 1, 1], [], []>} : vector<24x256xbf16>, vector<256x128xbf16>, vector<24x128xf32> -> vector<24x128xf32>
      %c0_46 = arith.constant 0 : index
      %c0_47 = arith.constant 0 : index
      %86 = vector.load %arg14[%c0_46, %c0_47] : memref<1x128xf32, #tpu.memory_space<vmem>>, vector<1x128xf32>
      %87 = vector.broadcast %86 : vector<1x128xf32> to vector<24x128xf32>
      %88 = arith.addf %85, %87 : vector<24x128xf32>
      %89 = arith.addf %44, %88 : vector<24x128xf32>
      %c0_48 = arith.constant 0 : index
      %c0_49 = arith.constant 0 : index
      %c0_50 = arith.constant 0 : index
      %90 = vector.load %arg15[%c0_48, %c0_49, %c0_50] : memref<1x24x128xf32, #tpu.memory_space<vmem>>, vector<1x24x128xf32>
      %91 = vector.shape_cast %90 : vector<1x24x128xf32> to vector<24x128xf32>
      %92 = vector.shape_cast %89 : vector<24x128xf32> to vector<1x24x128xf32>
      tpu.vector_store %arg15[%c0_48, %c0_49, %c0_50], %92 {strides = array<i32>} : memref<1x24x128xf32, #tpu.memory_space<vmem>>, vector<1x24x128xf32>,
    } else {
    }
    return
  }
  func.func @transform_0(%arg0: i32, %arg1: i32) -> (i32, i32, i32) {
    %c0_i32 = arith.constant 0 : i32
    %c0_i32_0 = arith.constant 0 : i32
    %c0_i32_1 = arith.constant 0 : i32
    return %arg0, %c0_i32, %c0_i32_0 : i32, i32, i32
  }
  func.func @transform_1(%arg0: i32, %arg1: i32) -> (i32, i32) {
    %c0_i32 = arith.constant 0 : i32
    %c0_i32_0 = arith.constant 0 : i32
    %c0_i32_1 = arith.constant 0 : i32
    return %c0_i32, %c0_i32_0 : i32, i32
  }
  func.func @transform_2(%arg0: i32, %arg1: i32) -> (i32, i32) {
    %c0_i32 = arith.constant 0 : i32
    %c0_i32_0 = arith.constant 0 : i32
    %c0_i32_1 = arith.constant 0 : i32
    return %c0_i32, %c0_i32_0 : i32, i32
  }
  func.func @transform_3(%arg0: i32, %arg1: i32) -> (i32, i32) {
    %c0_i32 = arith.constant 0 : i32
    %c0_i32_0 = arith.constant 0 : i32
    %c0_i32_1 = arith.constant 0 : i32
    return %c0_i32, %c0_i32_0 : i32, i32
  }
  func.func @transform_4(%arg0: i32, %arg1: i32) -> (i32, i32) {
    %c0_i32 = arith.constant 0 : i32
    %c0_i32_0 = arith.constant 0 : i32
    %c0_i32_1 = arith.constant 0 : i32
    return %c0_i32, %c0_i32_0 : i32, i32
  }
  func.func @transform_5(%arg0: i32, %arg1: i32) -> (i32, i32) {
    %c0_i32 = arith.constant 0 : i32
    %c0_i32_0 = arith.constant 0 : i32
    %c0_i32_1 = arith.constant 0 : i32
    return %c0_i32, %c0_i32_0 : i32, i32
  }
  func.func @transform_6(%arg0: i32, %arg1: i32) -> (i32, i32) {
    %c0_i32 = arith.constant 0 : i32
    %c0_i32_0 = arith.constant 0 : i32
    %c0_i32_1 = arith.constant 0 : i32
    return %c0_i32, %c0_i32_0 : i32, i32
  }
  func.func @transform_7(%arg0: i32, %arg1: i32) -> (i32, i32, i32) {
    %c0_i32 = arith.constant 0 : i32
    %c0_i32_0 = arith.constant 0 : i32
    %c0_i32_1 = arith.constant 0 : i32
    return %arg1, %c0_i32, %c0_i32_0 : i32, i32, i32
  }
  func.func @transform_8(%arg0: i32, %arg1: i32) -> (i32, i32) {
    %c0_i32 = arith.constant 0 : i32
    %c0_i32_0 = arith.constant 0 : i32
    %c0_i32_1 = arith.constant 0 : i32
    return %c0_i32, %c0_i32_0 : i32, i32
  }
  func.func @transform_9(%arg0: i32, %arg1: i32) -> (i32, i32) {
    %c0_i32 = arith.constant 0 : i32
    %c0_i32_0 = arith.constant 0 : i32
    %c0_i32_1 = arith.constant 0 : i32
    return %c0_i32, %c0_i32_0 : i32, i32
  }
  func.func @transform_10(%arg0: i32, %arg1: i32) -> (i32, i32) {
    %c0_i32 = arith.constant 0 : i32
    %c0_i32_0 = arith.constant 0 : i32
    %c0_i32_1 = arith.constant 0 : i32
    return %c0_i32, %c0_i32_0 : i32, i32
  }
  func.func @transform_11(%arg0: i32, %arg1: i32) -> (i32, i32) {
    %c0_i32 = arith.constant 0 : i32
    %c0_i32_0 = arith.constant 0 : i32
    %c0_i32_1 = arith.constant 0 : i32
    return %c0_i32, %c0_i32_0 : i32, i32
  }
  func.func @transform_12(%arg0: i32, %arg1: i32) -> (i32, i32) {
    %c0_i32 = arith.constant 0 : i32
    %c0_i32_0 = arith.constant 0 : i32
    %c0_i32_1 = arith.constant 0 : i32
    return %c0_i32, %c0_i32_0 : i32, i32
  }
  func.func @transform_13(%arg0: i32, %arg1: i32) -> (i32, i32, i32) {
    %c0_i32 = arith.constant 0 : i32
    %c0_i32_0 = arith.constant 0 : i32
    %c0_i32_1 = arith.constant 0 : i32
    return %arg0, %c0_i32, %c0_i32_0 : i32, i32, i32
  }
}

</mosaic_0001>

<llo_original>
// kernel: tpu_custom_call.1
$region0: #{tpu_custom_call.1}
  #allocation0 [shape = 'u32[]', space=smem, size = 0x4, offset = 0x4, fixed_abs, tag = 'smem constant byte address 0x4 - core index']
  #allocation1 [shape = 'u32[72,128]{1,0:T(1,128)}', space=vmem, size = 0x9000, scoped, tag = 'internal scratch']
  #allocation2 [shape = 'bf16[12,24,32]{2,1,0:T(8,128)(2,1)}', space=vmem, size = 0x12000, scoped, tag = 'scratch operand']
  #allocation3 [shape = 'f32[24,128]{1,0:T(8,128)}', space=vmem, size = 0x3000, scoped, tag = 'scratch operand']
  %s0 = inlined_call_operand.hbm [shape: f32[2,24,128], index: 0, kind: input, shape index: {}]
  %s1 = inlined_call_operand.hbm [shape: f32[1,128], index: 1, kind: input, shape index: {}]
  %s2 = inlined_call_operand.hbm [shape: f32[1,128], index: 2, kind: input, shape index: {}]
  %s3 = inlined_call_operand.hbm [shape: f32[1,128], index: 3, kind: input, shape index: {}]
  %s4 = inlined_call_operand.hbm [shape: f32[1,128], index: 4, kind: input, shape index: {}]
  %s5 = inlined_call_operand.hbm [shape: bf16[128,384], index: 5, kind: input, shape index: {}]
  %s6 = inlined_call_operand.vmem [shape: f32[1,384], index: 6, kind: input, shape index: {}]
  %s7 = inlined_call_operand.hbm [shape: bf16[4,32,128], index: 7, kind: input, shape index: {}]
  %s8 = inlined_call_operand.vmem [shape: f32[1,128], index: 8, kind: input, shape index: {}]
  %s9 = inlined_call_operand.hbm [shape: bf16[128,256], index: 9, kind: input, shape index: {}]
  %s10 = inlined_call_operand.vmem [shape: f32[1,256], index: 10, kind: input, shape index: {}]
  %s11 = inlined_call_operand.hbm [shape: bf16[256,128], index: 11, kind: input, shape index: {}]
  %s12 = inlined_call_operand.vmem [shape: f32[1,128], index: 12, kind: input, shape index: {}]
  %s13 = inlined_call_operand.hbm [shape: f32[2,24,128], index: 13, kind: output, shape index: {}]
  %s14 = sld [smem:[#allocation0]]
  $region129: #{tpu_custom_call.1} parent=0
    _
  %s16 = ssub.s32 1, %s14
  %s17 = scalar_select 0, %s16, %s14
  $region1: #{tpu_custom_call.1} parent=0
    #allocation4 [shape = 'u8[24576]{0}', space=vmem, size = 0x6000, scoped, tag = 'input window, operand 0']
    #allocation5 [shape = 's32[2]{0}', space=sflag, size = 0x8, scoped, tag = 'scoped memory for tpu_custom_call.1']
    #allocation6 [shape = 's32[2]{0}', space=sflag, size = 0x8, scoped, tag = 'scoped memory for tpu_custom_call.1']
    #allocation7 [shape = 'u8[512]{0}', space=vmem, size = 0x400, scoped, tag = 'input window, operand 1, single buffered']
    #allocation8 [shape = 's32[1]{0}', space=sflag, size = 0x4, scoped, tag = 'scoped memory for tpu_custom_call.1']
    #allocation9 [shape = 'u8[512]{0}', space=vmem, size = 0x400, scoped, tag = 'input window, operand 2, single buffered']
    #allocation10 [shape = 'u8[512]{0}', space=vmem, size = 0x400, scoped, tag = 'input window, operand 3, single buffered']
    #allocation11 [shape = 's32[1]{0}', space=sflag, size = 0x4, scoped, tag = 'scoped memory for tpu_custom_call.1']
    #allocation12 [shape = 'u8[512]{0}', space=vmem, size = 0x400, scoped, tag = 'input window, operand 4, single buffered']
    #allocation13 [shape = 'u8[98304]{0}', space=vmem, size = 0x18000, scoped, tag = 'input window, operand 5, single buffered']
    #allocation14 [shape = 's32[1]{0}', space=sflag, size = 0x4, scoped, tag = 'scoped memory for tpu_custom_call.1']
    #allocation15 [shape = 'u8[16384]{0}', space=vmem, size = 0x4000, scoped, tag = 'input window, operand 7']
    #allocation16 [shape = 'u8[65536]{0}', space=vmem, size = 0x10000, scoped, tag = 'input window, operand 9, single buffered']
    #allocation17 [shape = 'u8[65536]{0}', space=vmem, size = 0x10000, scoped, tag = 'input window, operand 11, single buffered']
    #allocation18 [shape = 'u8[24576]{0}', space=vmem, size = 0x6000, scoped, tag = 'output window, operand 0']
    %18 = vsyncpa [#allocation5], 0
    %s19 = scalar_lea.sflag [#allocation5], 1
    %20 = vsyncpa %s19, 0
    %21 = vsyncpa [#allocation8], 0
    %22 = vsyncpa [#allocation11], 0
    %23 = vsyncpa [#allocation14], 0
    %24 = vsyncpa [#allocation6], 0
    %s25 = scalar_lea.sflag [#allocation6], 1
    %26 = vsyncpa %s25, 0
    loop: start=0, step=1, limit=10
    $region2: #{tpu_custom_call.1} parent=1 // loop_pre_header
      _
    $region3: #{tpu_custom_call.1} parent=1 // loop_header
      %s28 = sphi 0, %s32
      %p29 = scmp.ge.s32.totalorder %s28, 10
      %s35 = sphi 0, %s47
      %s36 = sphi 0, %s43
      %s37 = sphi 0, %s35
      %s38 = sphi 0, %s36
      %s39 = sphi 0, %s37
      %s40 = sphi 0, %s38
      %s50 = sphi 0, %s52
      %s53 = sphi 0, %s50
      %s54 = sphi 0, %s53
      %s70 = sphi 0, %s54
      %s74 = sphi 0, %s74
      %s76 = sphi 0, %s74
      %s77 = sphi 0, %s76
      %s91 = sphi 0, %s77
      %s95 = sphi 0, %s95
      %s97 = sphi 0, %s95
      %s98 = sphi 0, %s97
      %s112 = sphi 0, %s98
      %s116 = sphi 0, %s116
      %s118 = sphi 0, %s116
      %s119 = sphi 0, %s118
      %s133 = sphi 0, %s119
      %s137 = sphi 0, %s137
      %s139 = sphi 0, %s137
      %s140 = sphi 0, %s139
      %s154 = sphi 0, %s140
      %s158 = sphi 0, %s158
      %s160 = sphi 0, %s158
      %s161 = sphi 0, %s160
      %s175 = sphi 0, %s161
      %s179 = sphi 0, %s179
      %s181 = sphi 0, %s179
      %s182 = sphi 0, %s181
      %s196 = sphi 0, %s182
      %s202 = sphi 0, %s204
      %s205 = sphi 0, %s202
      %s206 = sphi 0, %s205
      %s222 = sphi 0, %s206
      %s226 = sphi 0, %s226
      %s228 = sphi 0, %s226
      %s229 = sphi 0, %s228
      %s243 = sphi 0, %s229
      %s247 = sphi 0, %s247
      %s249 = sphi 0, %s247
      %s250 = sphi 0, %s249
      %s264 = sphi 0, %s250
      %s268 = sphi 0, %s268
      %s270 = sphi 0, %s268
      %s271 = sphi 0, %s270
      %s285 = sphi 0, %s271
      %s289 = sphi 0, %s289
      %s291 = sphi 0, %s289
      %s292 = sphi 0, %s291
      %s306 = sphi 0, %s292
      %s310 = sphi 0, %s310
      %s312 = sphi 0, %s310
      %s313 = sphi 0, %s312
      %s327 = sphi 0, %s313
      %s333 = sphi 0, %s335
      %s336 = sphi 0, %s333
      %s337 = sphi 0, %s336
      %s353 = sphi 0, %s337
    $region4: #{tpu_custom_call.1} parent=1 // loop_header_branch
      %31 = sbr.rel (%p29) target = $region8
    $region5: #{tpu_custom_call.1} parent=1 // loop_body
      %s33 = ssub.s32 %s28, 1
      %s34 = ssub.s32 %s28, 2
      %s41 = sadd.s32 1, %s36
      %p42 = scmp.ge.s32.totalorder %s41, 4
      %s43 = scalar_select %p42, 0, %s41
      %s44 = sadd.s32 1, %s35
      %s45 = scalar_select %p42, %s44, %s35
      %p46 = scmp.ge.s32.totalorder %s45, 2
      %s47 = scalar_select %p46, 0, %s45
      %s48 = ssub.s32 %s35, %s47
      %p49 = scmp.eq.s32.totalorder %s48, 0
      %s51 = sadd.s32 %s50, 1
      %s52 = scalar_select %p49, %s50, %s51
      %p55 = pneg %p49
      %p56 = scmp.eq.s32.totalorder %s28, 7
      %p57 = por %p55, %p56
      %p58 = scmp.ne.s32.totalorder %s50, %s53
      %p59 = scmp.eq.s32.totalorder %s28, 0
      %p60 = por %p58, %p59
      %p61 = scmp.ne.s32.totalorder %s50, %s53
      %p62 = scmp.eq.s32.totalorder %s33, 7
      %p63 = por %p61, %p62
      %p64 = scmp.ne.s32.totalorder %s53, %s54
      %p65 = scmp.eq.s32.totalorder %s33, 0
      %p66 = por %p64, %p65
      %p67 = scmp.ne.s32.totalorder %s53, %s54
      %p68 = scmp.eq.s32.totalorder %s34, 7
      %p69 = por %p67, %p68
      %p71 = scmp.ne.s32.totalorder %s54, %s70
      %p72 = scmp.eq.s32.totalorder %s34, 0
      %p73 = por %p71, %p72
      %s75 = sadd.s32 %s74, 1
      %p78 = scmp.eq.s32.totalorder %s28, 7
      %p79 = scmp.ne.s32.totalorder %s74, %s76
      %p80 = scmp.eq.s32.totalorder %s28, 0
      %p81 = por %p79, %p80
      %p82 = scmp.ne.s32.totalorder %s74, %s76
      %p83 = scmp.eq.s32.totalorder %s33, 7
      %p84 = por %p82, %p83
      %p85 = scmp.ne.s32.totalorder %s76, %s77
      %p86 = scmp.eq.s32.totalorder %s33, 0
      %p87 = por %p85, %p86
      %p88 = scmp.ne.s32.totalorder %s76, %s77
      %p89 = scmp.eq.s32.totalorder %s34, 7
      %p90 = por %p88, %p89
      %p92 = scmp.ne.s32.totalorder %s77, %s91
      %p93 = scmp.eq.s32.totalorder %s34, 0
      %p94 = por %p92, %p93
      %s96 = sadd.s32 %s95, 1
      %p99 = scmp.eq.s32.totalorder %s28, 7
      %p100 = scmp.ne.s32.totalorder %s95, %s97
      %p101 = scmp.eq.s32.totalorder %s28, 0
      %p102 = por %p100, %p101
      %p103 = scmp.ne.s32.totalorder %s95, %s97
      %p104 = scmp.eq.s32.totalorder %s33, 7
      %p105 = por %p103, %p104
      %p106 = scmp.ne.s32.totalorder %s97, %s98
      %p107 = scmp.eq.s32.totalorder %s33, 0
      %p108 = por %p106, %p107
      %p109 = scmp.ne.s32.totalorder %s97, %s98
      %p110 = scmp.eq.s32.totalorder %s34, 7
      %p111 = por %p109, %p110
      %p113 = scmp.ne.s32.totalorder %s98, %s112
      %p114 = scmp.eq.s32.totalorder %s34, 0
      %p115 = por %p113, %p114
      %s117 = sadd.s32 %s116, 1
      %p120 = scmp.eq.s32.totalorder %s28, 7
      %p121 = scmp.ne.s32.totalorder %s116, %s118
      %p122 = scmp.eq.s32.totalorder %s28, 0
      %p123 = por %p121, %p122
      %p124 = scmp.ne.s32.totalorder %s116, %s118
      %p125 = scmp.eq.s32.totalorder %s33, 7
      %p126 = por %p124, %p125
      %p127 = scmp.ne.s32.totalorder %s118, %s119
      %p128 = scmp.eq.s32.totalorder %s33, 0
      %p129 = por %p127, %p128
      %p130 = scmp.ne.s32.totalorder %s118, %s119
      %p131 = scmp.eq.s32.totalorder %s34, 7
      %p132 = por %p130, %p131
      %p134 = scmp.ne.s32.totalorder %s119, %s133
      %p135 = scmp.eq.s32.totalorder %s34, 0
      %p136 = por %p134, %p135
      %s138 = sadd.s32 %s137, 1
      %p141 = scmp.eq.s32.totalorder %s28, 7
      %p142 = scmp.ne.s32.totalorder %s137, %s139
      %p143 = scmp.eq.s32.totalorder %s28, 0
      %p144 = por %p142, %p143
      %p145 = scmp.ne.s32.totalorder %s137, %s139
      %p146 = scmp.eq.s32.totalorder %s33, 7
      %p147 = por %p145, %p146
      %p148 = scmp.ne.s32.totalorder %s139, %s140
      %p149 = scmp.eq.s32.totalorder %s33, 0
      %p150 = por %p148, %p149
      %p151 = scmp.ne.s32.totalorder %s139, %s140
      %p152 = scmp.eq.s32.totalorder %s34, 7
      %p153 = por %p151, %p152
      %p155 = scmp.ne.s32.totalorder %s140, %s154
      %p156 = scmp.eq.s32.totalorder %s34, 0
      %p157 = por %p155, %p156
      %s159 = sadd.s32 %s158, 1
      %p162 = scmp.eq.s32.totalorder %s28, 7
      %p163 = scmp.ne.s32.totalorder %s158, %s160
      %p164 = scmp.eq.s32.totalorder %s28, 0
      %p165 = por %p163, %p164
      %p166 = scmp.ne.s32.totalorder %s158, %s160
      %p167 = scmp.eq.s32.totalorder %s33, 7
      %p168 = por %p166, %p167
      %p169 = scmp.ne.s32.totalorder %s160, %s161
      %p170 = scmp.eq.s32.totalorder %s33, 0
      %p171 = por %p169, %p170
      %p172 = scmp.ne.s32.totalorder %s160, %s161
      %p173 = scmp.eq.s32.totalorder %s34, 7
      %p174 = por %p172, %p173
      %p176 = scmp.ne.s32.totalorder %s161, %s175
      %p177 = scmp.eq.s32.totalorder %s34, 0
      %p178 = por %p176, %p177
      %s180 = sadd.s32 %s179, 1
      %p183 = scmp.eq.s32.totalorder %s28, 7
      %p184 = scmp.ne.s32.totalorder %s179, %s181
      %p185 = scmp.eq.s32.totalorder %s28, 0
      %p186 = por %p184, %p185
      %p187 = scmp.ne.s32.totalorder %s179, %s181
      %p188 = scmp.eq.s32.totalorder %s33, 7
      %p189 = por %p187, %p188
      %p190 = scmp.ne.s32.totalorder %s181, %s182
      %p191 = scmp.eq.s32.totalorder %s33, 0
      %p192 = por %p190, %p191
      %p193 = scmp.ne.s32.totalorder %s181, %s182
      %p194 = scmp.eq.s32.totalorder %s34, 7
      %p195 = por %p193, %p194
      %p197 = scmp.ne.s32.totalorder %s182, %s196
      %p198 = scmp.eq.s32.totalorder %s34, 0
      %p199 = por %p197, %p198
      %s200 = ssub.s32 %s36, %s43
      %p201 = scmp.eq.s32.totalorder %s200, 0
      %s203 = sadd.s32 %s202, 1
      %s204 = scalar_select %p201, %s202, %s203
      %p207 = pneg %p201
      %p208 = scmp.eq.s32.totalorder %s28, 7
      %p209 = por %p207, %p208
      %p210 = scmp.ne.s32.totalorder %s202, %s205
      %p211 = scmp.eq.s32.totalorder %s28, 0
      %p212 = por %p210, %p211
      %p213 = scmp.ne.s32.totalorder %s202, %s205
      %p214 = scmp.eq.s32.totalorder %s33, 7
      %p215 = por %p213, %p214
      %p216 = scmp.ne.s32.totalorder %s205, %s206
      %p217 = scmp.eq.s32.totalorder %s33, 0
      %p218 = por %p216, %p217
      %p219 = scmp.ne.s32.totalorder %s205, %s206
      %p220 = scmp.eq.s32.totalorder %s34, 7
      %p221 = por %p219, %p220
      %p223 = scmp.ne.s32.totalorder %s206, %s222
      %p224 = scmp.eq.s32.totalorder %s34, 0
      %p225 = por %p223, %p224
      %s227 = sadd.s32 %s226, 1
      %p230 = scmp.eq.s32.totalorder %s28, 7
      %p231 = scmp.ne.s32.totalorder %s226, %s228
      %p232 = scmp.eq.s32.totalorder %s28, 0
      %p233 = por %p231, %p232
      %p234 = scmp.ne.s32.totalorder %s226, %s228
      %p235 = scmp.eq.s32.totalorder %s33, 7
      %p236 = por %p234, %p235
      %p237 = scmp.ne.s32.totalorder %s228, %s229
      %p238 = scmp.eq.s32.totalorder %s33, 0
      %p239 = por %p237, %p238
      %p240 = scmp.ne.s32.totalorder %s228, %s229
      %p241 = scmp.eq.s32.totalorder %s34, 7
      %p242 = por %p240, %p241
      %p244 = scmp.ne.s32.totalorder %s229, %s243
      %p245 = scmp.eq.s32.totalorder %s34, 0
      %p246 = por %p244, %p245
      %s248 = sadd.s32 %s247, 1
      %p251 = scmp.eq.s32.totalorder %s28, 7
      %p252 = scmp.ne.s32.totalorder %s247, %s249
      %p253 = scmp.eq.s32.totalorder %s28, 0
      %p254 = por %p252, %p253
      %p255 = scmp.ne.s32.totalorder %s247, %s249
      %p256 = scmp.eq.s32.totalorder %s33, 7
      %p257 = por %p255, %p256
      %p258 = scmp.ne.s32.totalorder %s249, %s250
      %p259 = scmp.eq.s32.totalorder %s33, 0
      %p260 = por %p258, %p259
      %p261 = scmp.ne.s32.totalorder %s249, %s250
      %p262 = scmp.eq.s32.totalorder %s34, 7
      %p263 = por %p261, %p262
      %p265 = scmp.ne.s32.totalorder %s250, %s264
      %p266 = scmp.eq.s32.totalorder %s34, 0
      %p267 = por %p265, %p266
      %s269 = sadd.s32 %s268, 1
      %p272 = scmp.eq.s32.totalorder %s28, 7
      %p273 = scmp.ne.s32.totalorder %s268, %s270
      %p274 = scmp.eq.s32.totalorder %s28, 0
      %p275 = por %p273, %p274
      %p276 = scmp.ne.s32.totalorder %s268, %s270
      %p277 = scmp.eq.s32.totalorder %s33, 7
      %p278 = por %p276, %p277
      %p279 = scmp.ne.s32.totalorder %s270, %s271
      %p280 = scmp.eq.s32.totalorder %s33, 0
      %p281 = por %p279, %p280
      %p282 = scmp.ne.s32.totalorder %s270, %s271
      %p283 = scmp.eq.s32.totalorder %s34, 7
      %p284 = por %p282, %p283
      %p286 = scmp.ne.s32.totalorder %s271, %s285
      %p287 = scmp.eq.s32.totalorder %s34, 0
      %p288 = por %p286, %p287
      %s290 = sadd.s32 %s289, 1
      %p293 = scmp.eq.s32.totalorder %s28, 7
      %p294 = scmp.ne.s32.totalorder %s289, %s291
      %p295 = scmp.eq.s32.totalorder %s28, 0
      %p296 = por %p294, %p295
      %p297 = scmp.ne.s32.totalorder %s289, %s291
      %p298 = scmp.eq.s32.totalorder %s33, 7
      %p299 = por %p297, %p298
      %p300 = scmp.ne.s32.totalorder %s291, %s292
      %p301 = scmp.eq.s32.totalorder %s33, 0
      %p302 = por %p300, %p301
      %p303 = scmp.ne.s32.totalorder %s291, %s292
      %p304 = scmp.eq.s32.totalorder %s34, 7
      %p305 = por %p303, %p304
      %p307 = scmp.ne.s32.totalorder %s292, %s306
      %p308 = scmp.eq.s32.totalorder %s34, 0
      %p309 = por %p307, %p308
      %s311 = sadd.s32 %s310, 1
      %p314 = scmp.eq.s32.totalorder %s28, 7
      %p315 = scmp.ne.s32.totalorder %s310, %s312
      %p316 = scmp.eq.s32.totalorder %s28, 0
      %p317 = por %p315, %p316
      %p318 = scmp.ne.s32.totalorder %s310, %s312
      %p319 = scmp.eq.s32.totalorder %s33, 7
      %p320 = por %p318, %p319
      %p321 = scmp.ne.s32.totalorder %s312, %s313
      %p322 = scmp.eq.s32.totalorder %s33, 0
      %p323 = por %p321, %p322
      %p324 = scmp.ne.s32.totalorder %s312, %s313
      %p325 = scmp.eq.s32.totalorder %s34, 7
      %p326 = por %p324, %p325
      %p328 = scmp.ne.s32.totalorder %s313, %s327
      %p329 = scmp.eq.s32.totalorder %s34, 0
      %p330 = por %p328, %p329
      %s331 = ssub.s32 %s35, %s47
      %p332 = scmp.eq.s32.totalorder %s331, 0
      %s334 = sadd.s32 %s333, 1
      %s335 = scalar_select %p332, %s333, %s334
      %p338 = pneg %p332
      %p339 = scmp.eq.s32.totalorder %s28, 7
      %p340 = por %p338, %p339
      %p341 = scmp.ne.s32.totalorder %s333, %s336
      %p342 = scmp.eq.s32.totalorder %s28, 0
      %p343 = por %p341, %p342
      %p344 = scmp.ne.s32.totalorder %s333, %s336
      %p345 = scmp.eq.s32.totalorder %s33, 7
      %p346 = por %p344, %p345
      %p347 = scmp.ne.s32.totalorder %s336, %s337
      %p348 = scmp.eq.s32.totalorder %s33, 0
      %p349 = por %p347, %p348
      %p350 = scmp.ne.s32.totalorder %s336, %s337
      %p351 = scmp.eq.s32.totalorder %s34, 7
      %p352 = por %p350, %p351
      %p354 = scmp.ne.s32.totalorder %s337, %s353
      %p355 = scmp.eq.s32.totalorder %s34, 0
      %p356 = por %p354, %p355
      %p357 = scmp.le.s32.totalorder 1, %s28
      %p358 = scmp.lt.s32.totalorder %s28, 9
      %p359 = pnand %p357, %p358
      %p360 = pneg %p359
      // Predicated region
      $region9: #{tpu_custom_call.1} parent=5 // pred_check
        _
      $region10: #{tpu_custom_call.1} parent=5 // pred_check_branch
        %362 = sbr.rel (%p359) target = $region12
      $region11: #{tpu_custom_call.1} parent=5 // pred_region
        %s363 = ssub.s32 %s28, 1
        // Predicated region
        $region13: #{tpu_custom_call.1} parent=11 // pred_check
          %p364 = pneg %p87
        $region14: #{tpu_custom_call.1} parent=11 // pred_check_branch
          %366 = sbr.rel (%p364) target = $region16
        $region15: #{tpu_custom_call.1} parent=11 // pred_region
          %368 = vsyncadd [#allocation8], 0
          %s370 = sshll.u32 %s1, 4
          %s371 = int_to_ptr.hbm [resolvable:$true] %s370
          %s372 = sshll.u32 [#allocation7], 4
          %s373 = int_to_ptr.vmem [resolvable:$true] %s372
          %375 = dma.hbm_to_vmem [thread:$0]  %s371, 16, %s373, [#allocation8]
        $region16: #{tpu_custom_call.1} parent=11 // pred_fallthru
          _
        // Predicated region
        $region17: #{tpu_custom_call.1} parent=11 // pred_check
          %p376 = pneg %p108
        $region18: #{tpu_custom_call.1} parent=11 // pred_check_branch
          %378 = sbr.rel (%p376) target = $region20
        $region19: #{tpu_custom_call.1} parent=11 // pred_region
          %380 = vsyncadd [#allocation8], 0
          %s382 = sshll.u32 %s2, 4
          %s383 = int_to_ptr.hbm [resolvable:$true] %s382
          %s384 = sshll.u32 [#allocation9], 4
          %s385 = int_to_ptr.vmem [resolvable:$true] %s384
          %387 = dma.hbm_to_vmem [thread:$0]  %s383, 16, %s385, [#allocation8]
        $region20: #{tpu_custom_call.1} parent=11 // pred_fallthru
          _
        // Predicated region
        $region21: #{tpu_custom_call.1} parent=11 // pred_check
          %p388 = pneg %p129
        $region22: #{tpu_custom_call.1} parent=11 // pred_check_branch
          %390 = sbr.rel (%p388) target = $region24
        $region23: #{tpu_custom_call.1} parent=11 // pred_region
          %392 = vsyncadd [#allocation11], 0
          %s394 = sshll.u32 %s3, 4
          %s395 = int_to_ptr.hbm [resolvable:$true] %s394
          %s396 = sshll.u32 [#allocation10], 4
          %s397 = int_to_ptr.vmem [resolvable:$true] %s396
          %399 = dma.hbm_to_vmem [thread:$0]  %s395, 16, %s397, [#allocation11]
        $region24: #{tpu_custom_call.1} parent=11 // pred_fallthru
          _
        // Predicated region
        $region25: #{tpu_custom_call.1} parent=11 // pred_check
          %p400 = pneg %p150
        $region26: #{tpu_custom_call.1} parent=11 // pred_check_branch
          %402 = sbr.rel (%p400) target = $region28
        $region27: #{tpu_custom_call.1} parent=11 // pred_region
          %404 = vsyncadd [#allocation11], 0
          %s406 = sshll.u32 %s4, 4
          %s407 = int_to_ptr.hbm [resolvable:$true] %s406
          %s408 = sshll.u32 [#allocation12], 4
          %s409 = int_to_ptr.vmem [resolvable:$true] %s408
          %411 = dma.hbm_to_vmem [thread:$0]  %s407, 16, %s409, [#allocation11]
        $region28: #{tpu_custom_call.1} parent=11 // pred_fallthru
          _
        // Predicated region
        $region29: #{tpu_custom_call.1} parent=11 // pred_check
          %p412 = pneg %p171
        $region30: #{tpu_custom_call.1} parent=11 // pred_check_branch
          %414 = sbr.rel (%p412) target = $region32
        $region31: #{tpu_custom_call.1} parent=11 // pred_region
          %416 = vsyncadd [#allocation14], 0
          %s417 = sshll.u32 %s5, 4
          %s418 = int_to_ptr.hbm [resolvable:$true] %s417
          %s419 = sshll.u32 [#allocation13], 4
          %s420 = int_to_ptr.vmem [resolvable:$true] %s419
          %425 = dma.hbm_to_vmem [thread:$0]  %s418, 3072, %s420, [#allocation14], 192, 192, 12
        $region32: #{tpu_custom_call.1} parent=11 // pred_fallthru
          _
        // Predicated region
        $region33: #{tpu_custom_call.1} parent=11 // pred_check
          %p426 = pneg %p192
        $region34: #{tpu_custom_call.1} parent=11 // pred_check_branch
          %428 = sbr.rel (%p426) target = $region36
        $region35: #{tpu_custom_call.1} parent=11 // pred_region
          _
        $region36: #{tpu_custom_call.1} parent=11 // pred_fallthru
          _
        // Predicated region
        $region37: #{tpu_custom_call.1} parent=11 // pred_check
          %p429 = pneg %p239
        $region38: #{tpu_custom_call.1} parent=11 // pred_check_branch
          %431 = sbr.rel (%p429) target = $region40
        $region39: #{tpu_custom_call.1} parent=11 // pred_region
          _
        $region40: #{tpu_custom_call.1} parent=11 // pred_fallthru
          _
        // Predicated region
        $region41: #{tpu_custom_call.1} parent=11 // pred_check
          %p432 = pneg %p260
        $region42: #{tpu_custom_call.1} parent=11 // pred_check_branch
          %434 = sbr.rel (%p432) target = $region44
        $region43: #{tpu_custom_call.1} parent=11 // pred_region
          %436 = vsyncadd [#allocation8], 0
          %s437 = sshll.u32 %s9, 4
          %s438 = int_to_ptr.hbm [resolvable:$true] %s437
          %s439 = sshll.u32 [#allocation16], 4
          %s440 = int_to_ptr.vmem [resolvable:$true] %s439
          %445 = dma.hbm_to_vmem [thread:$0]  %s438, 2048, %s440, [#allocation8], 128, 128, 8
        $region44: #{tpu_custom_call.1} parent=11 // pred_fallthru
          _
        // Predicated region
        $region45: #{tpu_custom_call.1} parent=11 // pred_check
          %p446 = pneg %p281
        $region46: #{tpu_custom_call.1} parent=11 // pred_check_branch
          %448 = sbr.rel (%p446) target = $region48
        $region47: #{tpu_custom_call.1} parent=11 // pred_region
          _
        $region48: #{tpu_custom_call.1} parent=11 // pred_fallthru
          _
        // Predicated region
        $region49: #{tpu_custom_call.1} parent=11 // pred_check
          %p449 = pneg %p302
        $region50: #{tpu_custom_call.1} parent=11 // pred_check_branch
          %451 = sbr.rel (%p449) target = $region52
        $region51: #{tpu_custom_call.1} parent=11 // pred_region
          %453 = vsyncadd [#allocation11], 0
          %s454 = sshll.u32 %s11, 4
          %s455 = int_to_ptr.hbm [resolvable:$true] %s454
          %s456 = sshll.u32 [#allocation17], 4
          %s457 = int_to_ptr.vmem [resolvable:$true] %s456
          %462 = dma.hbm_to_vmem [thread:$0]  %s455, 2048, %s457, [#allocation11], 64, 64, 4
        $region52: #{tpu_custom_call.1} parent=11 // pred_fallthru
          _
        // Predicated region
        $region53: #{tpu_custom_call.1} parent=11 // pred_check
          %p463 = pneg %p323
        $region54: #{tpu_custom_call.1} parent=11 // pred_check_branch
          %465 = sbr.rel (%p463) target = $region56
        $region55: #{tpu_custom_call.1} parent=11 // pred_region
          _
        $region56: #{tpu_custom_call.1} parent=11 // pred_fallthru
          _
      $region12: #{tpu_custom_call.1} parent=5 // pred_fallthru
        _
      %p466 = scmp.lt.s32.totalorder %s28, 8
      // Predicated region
      $region57: #{tpu_custom_call.1} parent=5 // pred_check
        %p467 = pneg %p466
      $region58: #{tpu_custom_call.1} parent=5 // pred_check_branch
        %469 = sbr.rel (%p467) target = $region60
      $region59: #{tpu_custom_call.1} parent=5 // pred_region
        // Predicated region
        $region61: #{tpu_custom_call.1} parent=59 // pred_check
          %p470 = pneg %p60
        $region62: #{tpu_custom_call.1} parent=59 // pred_check_branch
          %472 = sbr.rel (%p470) target = $region64
        $region63: #{tpu_custom_call.1} parent=59 // pred_region
          %s473 = sand.u32 %s28, 1
          %s474 = scalar_lea.sflag [#allocation5], %s473
          %s475 = sand.u32 %s50, 1
          %s476 = smul.addr %s475, 24
          %s477 = scalar_lea.vmem [#allocation4], %s476
          %479 = vsyncadd %s474, 0
          %s480 = smul.addr %s35, 3
          %s481 = smul.addr %s480, 8
          %s482 = scalar_lea.hbm %s0, %s481
          %s483 = sshll.u32 %s482, 4
          %s484 = int_to_ptr.hbm [resolvable:$true] %s483
          %s485 = sshll.u32 %s477, 4
          %s486 = int_to_ptr.vmem [resolvable:$true] %s485
          %491 = dma.hbm_to_vmem [thread:$0]  %s484, 384, %s486, %s474, 128, 128, 8
        $region64: #{tpu_custom_call.1} parent=59 // pred_fallthru
          _
        // Predicated region
        $region65: #{tpu_custom_call.1} parent=59 // pred_check
          %p492 = pneg %p212
        $region66: #{tpu_custom_call.1} parent=59 // pred_check_branch
          %494 = sbr.rel (%p492) target = $region68
        $region67: #{tpu_custom_call.1} parent=59 // pred_region
          %s495 = sand.u32 %s28, 1
          %s496 = scalar_lea.sflag [#allocation5], %s495
          %s497 = sand.u32 %s202, 1
          %s498 = smul.addr %s497, 16
          %s499 = scalar_lea.vmem [#allocation15], %s498
          %501 = vsyncadd %s496, 0
          %s502 = smul.addr %s36, 4
          %s503 = smul.addr %s502, 4
          %s504 = scalar_lea.hbm %s7, %s503
          %s505 = sshll.u32 %s504, 4
          %s506 = int_to_ptr.hbm [resolvable:$true] %s505
          %s507 = sshll.u32 %s499, 4
          %s508 = int_to_ptr.vmem [resolvable:$true] %s507
          %513 = dma.hbm_to_vmem [thread:$0]  %s506, 256, %s508, %s496, 64, 64, 4
        $region68: #{tpu_custom_call.1} parent=59 // pred_fallthru
          _
      $region60: #{tpu_custom_call.1} parent=5 // pred_fallthru
        _
      %p514 = scmp.le.s32.totalorder 1, %s28
      %p515 = scmp.lt.s32.totalorder %s28, 9
      %p516 = pnand %p514, %p515
      %p517 = pneg %p516
      // Predicated region
      $region69: #{tpu_custom_call.1} parent=5 // pred_check
        _
      $region70: #{tpu_custom_call.1} parent=5 // pred_check_branch
        %519 = sbr.rel (%p516) target = $region72
      $region71: #{tpu_custom_call.1} parent=5 // pred_region
        %s520 = ssub.s32 %s28, 1
        %s521 = sand.u32 %s33, 1
        %s522 = scalar_lea.sflag [#allocation5], %s521
        %s523 = sand.u32 %s53, 1
        %s524 = smul.addr %s523, 24
        %s525 = scalar_lea.vmem [#allocation4], %s524
        // Predicated region
        $region73: #{tpu_custom_call.1} parent=71 // pred_check
          %p526 = pneg %p66
        $region74: #{tpu_custom_call.1} parent=71 // pred_check_branch
          %528 = sbr.rel (%p526) target = $region76
        $region75: #{tpu_custom_call.1} parent=71 // pred_region
          %530 = dma.done %s522, 384
        $region76: #{tpu_custom_call.1} parent=71 // pred_fallthru
          _
        // Predicated region
        $region77: #{tpu_custom_call.1} parent=71 // pred_check
          %p531 = pneg %p87
        $region78: #{tpu_custom_call.1} parent=71 // pred_check_branch
          %533 = sbr.rel (%p531) target = $region80
        $region79: #{tpu_custom_call.1} parent=71 // pred_region
          %535 = dma.done [#allocation8], 16
        $region80: #{tpu_custom_call.1} parent=71 // pred_fallthru
          _
        // Predicated region
        $region81: #{tpu_custom_call.1} parent=71 // pred_check
          %p536 = pneg %p108
        $region82: #{tpu_custom_call.1} parent=71 // pred_check_branch
          %538 = sbr.rel (%p536) target = $region84
        $region83: #{tpu_custom_call.1} parent=71 // pred_region
          %540 = dma.done [#allocation8], 16
        $region84: #{tpu_custom_call.1} parent=71 // pred_fallthru
          _
        // Predicated region
        $region85: #{tpu_custom_call.1} parent=71 // pred_check
          %p541 = pneg %p129
        $region86: #{tpu_custom_call.1} parent=71 // pred_check_branch
          %543 = sbr.rel (%p541) target = $region88
        $region87: #{tpu_custom_call.1} parent=71 // pred_region
          %545 = dma.done [#allocation11], 16
        $region88: #{tpu_custom_call.1} parent=71 // pred_fallthru
          _
        // Predicated region
        $region89: #{tpu_custom_call.1} parent=71 // pred_check
          %p546 = pneg %p150
        $region90: #{tpu_custom_call.1} parent=71 // pred_check_branch
          %548 = sbr.rel (%p546) target = $region92
        $region91: #{tpu_custom_call.1} parent=71 // pred_region
          %550 = dma.done [#allocation11], 16
        $region92: #{tpu_custom_call.1} parent=71 // pred_fallthru
          _
        // Predicated region
        $region93: #{tpu_custom_call.1} parent=71 // pred_check
          %p551 = pneg %p171
        $region94: #{tpu_custom_call.1} parent=71 // pred_check_branch
          %553 = sbr.rel (%p551) target = $region96
        $region95: #{tpu_custom_call.1} parent=71 // pred_region
          %555 = dma.done [#allocation14], 3072
        $region96: #{tpu_custom_call.1} parent=71 // pred_fallthru
          _
        %s556 = sand.u32 %s33, 1
        %s557 = scalar_lea.sflag [#allocation5], %s556
        %s558 = sand.u32 %s205, 1
        %s559 = smul.addr %s558, 16
        %s560 = scalar_lea.vmem [#allocation15], %s559
        // Predicated region
        $region97: #{tpu_custom_call.1} parent=71 // pred_check
          %p561 = pneg %p218
        $region98: #{tpu_custom_call.1} parent=71 // pred_check_branch
          %563 = sbr.rel (%p561) target = $region100
        $region99: #{tpu_custom_call.1} parent=71 // pred_region
          %565 = dma.done %s557, 256
        $region100: #{tpu_custom_call.1} parent=71 // pred_fallthru
          _
        // Predicated region
        $region101: #{tpu_custom_call.1} parent=71 // pred_check
          %p566 = pneg %p260
        $region102: #{tpu_custom_call.1} parent=71 // pred_check_branch
          %568 = sbr.rel (%p566) target = $region104
        $region103: #{tpu_custom_call.1} parent=71 // pred_region
          %570 = dma.done [#allocation8], 2048
        $region104: #{tpu_custom_call.1} parent=71 // pred_fallthru
          _
        // Predicated region
        $region105: #{tpu_custom_call.1} parent=71 // pred_check
          %p571 = pneg %p302
        $region106: #{tpu_custom_call.1} parent=71 // pred_check_branch
          %573 = sbr.rel (%p571) target = $region108
        $region107: #{tpu_custom_call.1} parent=71 // pred_region
          %575 = dma.done [#allocation11], 2048
        $region108: #{tpu_custom_call.1} parent=71 // pred_fallthru
          _
        %s576 = sand.u32 %s33, 1
        %s577 = scalar_lea.sflag [#allocation5], %s576
        %s578 = sand.u32 %s53, 1
        %s579 = smul.addr %s578, 24
        %s580 = scalar_lea.vmem [#allocation4], %s579
        %p581 = pneg %p66
        %p582 = pneg %p63
        %p583 = pneg %p87
        %p584 = pneg %p84
        %p585 = pneg %p108
        %p586 = pneg %p105
        %p587 = pneg %p129
        %p588 = pneg %p126
        %p589 = pneg %p150
        %p590 = pneg %p147
        %p591 = pneg %p171
        %p592 = pneg %p168
        %p593 = pneg %p192
        %p594 = pneg %p189
        %s595 = sand.u32 %s33, 1
        %s596 = scalar_lea.sflag [#allocation5], %s595
        %s597 = sand.u32 %s205, 1
        %s598 = smul.addr %s597, 16
        %s599 = scalar_lea.vmem [#allocation15], %s598
        %p600 = pneg %p218
        %p601 = pneg %p215
        %p602 = pneg %p239
        %p603 = pneg %p236
        %p604 = pneg %p260
        %p605 = pneg %p257
        %p606 = pneg %p281
        %p607 = pneg %p278
        %p608 = pneg %p302
        %p609 = pneg %p299
        %p610 = pneg %p323
        %p611 = pneg %p320
        %p612 = pneg %p349
        %p613 = pneg %p346
        %s614 = sand.u32 %s336, 1
        %s615 = scalar_lea.sflag [#allocation6], %s614
        %s616 = sand.u32 %s336, 1
        %s617 = smul.addr %s616, 24
        %s618 = scalar_lea.vmem [#allocation18], %s617
        %p620 = scmp.eq.s32.totalorder %s38, 0
        // Predicated region
        $region109: #{tpu_custom_call.1} parent=71 // pred_check
          %p621 = pneg %p620
        $region110: #{tpu_custom_call.1} parent=71 // pred_check_branch
          %623 = sbr.rel (%p621) target = $region112
        $region111: #{tpu_custom_call.1} parent=71 // pred_region
          %v624 = vld [vmem:[%s525] sm:$0xff]
          %v625 = vld [vmem:[%s525 + $0x8] sm:$0xff]
          %v626 = vld [vmem:[%s525 + $0x10] sm:$0xff]
          %v627 = vld [vmem:[#allocation7] sm:$0x1]
          %v628 = vld [vmem:[#allocation9] sm:$0x1]
          %629 = vadd.xlane.f32.xlu0 %v624
          %v630 = vpop.xlane.xlu0 %629
          %631 = vadd.xlane.f32.xlu0 %v625
          %v632 = vpop.xlane.xlu0 %631
          %633 = vadd.xlane.f32.xlu0 %v626
          %v634 = vpop.xlane.xlu0 %633
          %v635 = vrcp.pop 128.0
          %v636 = vmul.f32 128.0, %v635
          %v637 = vsub.f32 1.0, %v636
          %v638 = vmul.f32 %v635, %v637
          %v639 = vadd.f32 %v635, %v638
          %vm640 = vweird.f32 %v635
          %v641 = vsel %vm640, %v635, %v639
          %v642 = vmul.f32 %v630, %v641
          %v643 = vmul.f32 %v632, %v641
          %v644 = vmul.f32 %v634, %v641
          %v645 = vsub.f32 %v624, %v642
          %v646 = vsub.f32 %v625, %v643
          %v647 = vsub.f32 %v626, %v644
          %v648 = vmul.f32 %v645, %v645
          %v649 = vmul.f32 %v646, %v646
          %v650 = vmul.f32 %v647, %v647
          %651 = vadd.xlane.f32.xlu0 %v648
          %v652 = vpop.xlane.xlu0 %651
          %653 = vadd.xlane.f32.xlu0 %v649
          %v654 = vpop.xlane.xlu0 %653
          %655 = vadd.xlane.f32.xlu0 %v650
          %v656 = vpop.xlane.xlu0 %655
          %v657 = vmul.f32 %v652, %v641
          %v658 = vmul.f32 %v654, %v641
          %v659 = vmul.f32 %v656, %v641
          %v660 = vadd.f32 %v657, 1e-05
          %v661 = vadd.f32 %v658, 1e-05
          %v662 = vadd.f32 %v659, 1e-05
          %v663 = vrsqrt.pop %v660
          %v664 = vmul.f32 %v663, %v660
          %v665 = vmul.f32 %v664, %v663
          %v666 = vmul.f32 0.5, %v665
          %v667 = vsub.f32 1.5, %v666
          %v668 = vmul.f32 %v663, %v667
          %vm669 = vweird.f32 %v660
          %vm670 = vweird.f32 %v663
          %vm671 = vmor %vm669, %vm670
          %v672 = vsel %vm671, %v663, %v668
          %v673 = vrsqrt.pop %v661
          %v674 = vmul.f32 %v673, %v661
          %v675 = vmul.f32 %v674, %v673
          %v676 = vmul.f32 0.5, %v675
          %v677 = vsub.f32 1.5, %v676
          %v678 = vmul.f32 %v673, %v677
          %vm679 = vweird.f32 %v661
          %vm680 = vweird.f32 %v673
          %vm681 = vmor %vm679, %vm680
          %v682 = vsel %vm681, %v673, %v678
          %v683 = vrsqrt.pop %v662
          %v684 = vmul.f32 %v683, %v662
          %v685 = vmul.f32 %v684, %v683
          %v686 = vmul.f32 0.5, %v685
          %v687 = vsub.f32 1.5, %v686
          %v688 = vmul.f32 %v683, %v687
          %vm689 = vweird.f32 %v662
          %vm690 = vweird.f32 %v683
          %vm691 = vmor %vm689, %vm690
          %v692 = vsel %vm691, %v683, %v688
          %v693 = vmul.f32 %v645, %v672
          %v694 = vmul.f32 %v646, %v682
          %v695 = vmul.f32 %v647, %v692
          %v697 = vperm.slane %v627, 0
          %v699 = vmul.f32 %v693, %v697
          %v700 = vmul.f32 %v694, %v697
          %v701 = vmul.f32 %v695, %v697
          %v703 = vperm.slane %v628, 0
          %v705 = vadd.f32 %v699, %v703
          %v706 = vadd.f32 %v700, %v703
          %v707 = vadd.f32 %v701, %v703
          %v708 = vpack.c.bf16 %v706, %v705
          %v709 = vpack.c.bf16 %v707, %v707
          %v710 = vld [vmem:[#allocation13] sm:$0xff]
          %v711 = vld [vmem:[#allocation13 + $0x8] sm:$0xf]
          %v712 = vld [vmem:[#allocation13 + $0xc] sm:$0xff]
          %v713 = vld [vmem:[#allocation13 + $0x14] sm:$0xf]
          %v714 = vld [vmem:[#allocation13 + $0x18] sm:$0xff]
          %v715 = vld [vmem:[#allocation13 + $0x20] sm:$0xf]
          %v716 = vld [vmem:[#allocation13 + $0x24] sm:$0xff]
          %v717 = vld [vmem:[#allocation13 + $0x2c] sm:$0xf]
          %v718 = vld [vmem:[#allocation13 + $0x30] sm:$0xff]
          %v719 = vld [vmem:[#allocation13 + $0x38] sm:$0xf]
          %v720 = vld [vmem:[#allocation13 + $0x3c] sm:$0xff]
          %v721 = vld [vmem:[#allocation13 + $0x44] sm:$0xf]
          %v722 = vld [vmem:[#allocation13 + $0x48] sm:$0xff]
          %v723 = vld [vmem:[#allocation13 + $0x50] sm:$0xf]
          %v724 = vld [vmem:[#allocation13 + $0x54] sm:$0xff]
          %v725 = vld [vmem:[#allocation13 + $0x5c] sm:$0xf]
          %v726 = vld [vmem:[#allocation13 + $0x60] sm:$0xff]
          %v727 = vld [vmem:[#allocation13 + $0x68] sm:$0xf]
          %v728 = vld [vmem:[#allocation13 + $0x6c] sm:$0xff]
          %v729 = vld [vmem:[#allocation13 + $0x74] sm:$0xf]
          %v730 = vld [vmem:[#allocation13 + $0x78] sm:$0xff]
          %v731 = vld [vmem:[#allocation13 + $0x80] sm:$0xf]
          %v732 = vld [vmem:[#allocation13 + $0x84] sm:$0xff]
          %v733 = vld [vmem:[#allocation13 + $0x8c] sm:$0xf]
          %v734 = vld [vmem:[#allocation13 + $0x90] sm:$0xff]
          %v735 = vld [vmem:[#allocation13 + $0x98] sm:$0xf]
          %v736 = vld [vmem:[#allocation13 + $0x9c] sm:$0xff]
          %v737 = vld [vmem:[#allocation13 + $0xa4] sm:$0xf]
          %v738 = vld [vmem:[#allocation13 + $0xa8] sm:$0xff]
          %v739 = vld [vmem:[#allocation13 + $0xb0] sm:$0xf]
          %v740 = vld [vmem:[#allocation13 + $0xb4] sm:$0xff]
          %v741 = vld [vmem:[#allocation13 + $0xbc] sm:$0xf]
          %v742 = vld [vmem:[%s6] sm:$0x7]
          %v744 = vperm.slane %v742, 0
          %v745 = vperm.slane %v742, 1
          %v746 = vperm.slane %v742, 2
          %v782 = vunpack.c.l.b16 %v710
          %v783 = vunpack.c.h.b16 %v710
          %v784 = vunpack.c.l.b16 %v711
          %v785 = vunpack.c.l.b16 %v712
          %v786 = vunpack.c.h.b16 %v712
          %v787 = vunpack.c.l.b16 %v713
          %v788 = vunpack.c.l.b16 %v714
          %v789 = vunpack.c.h.b16 %v714
          %v790 = vunpack.c.l.b16 %v715
          %v791 = vunpack.c.l.b16 %v716
          %v792 = vunpack.c.h.b16 %v716
          %v793 = vunpack.c.l.b16 %v717
          %v794 = vunpack.c.l.b16 %v718
          %v795 = vunpack.c.h.b16 %v718
          %v796 = vunpack.c.l.b16 %v719
          %v797 = vunpack.c.l.b16 %v720
          %v798 = vunpack.c.h.b16 %v720
          %v799 = vunpack.c.l.b16 %v721
          %v800 = vunpack.c.l.b16 %v722
          %v801 = vunpack.c.h.b16 %v722
          %v802 = vunpack.c.l.b16 %v723
          %v803 = vunpack.c.l.b16 %v724
          %v804 = vunpack.c.h.b16 %v724
          %v805 = vunpack.c.l.b16 %v725
          %v806 = vunpack.c.l.b16 %v726
          %v807 = vunpack.c.h.b16 %v726
          %v808 = vunpack.c.l.b16 %v727
          %v809 = vunpack.c.l.b16 %v728
          %v810 = vunpack.c.h.b16 %v728
          %v811 = vunpack.c.l.b16 %v729
          %v812 = vunpack.c.l.b16 %v730
          %v813 = vunpack.c.h.b16 %v730
          %v814 = vunpack.c.l.b16 %v731
          %v815 = vunpack.c.l.b16 %v732
          %v816 = vunpack.c.h.b16 %v732
          %v817 = vunpack.c.l.b16 %v733
          %v818 = vunpack.c.l.b16 %v734
          %v819 = vunpack.c.h.b16 %v734
          %v820 = vunpack.c.l.b16 %v735
          %v821 = vunpack.c.l.b16 %v736
          %v822 = vunpack.c.h.b16 %v736
          %v823 = vunpack.c.l.b16 %v737
          %v824 = vunpack.c.l.b16 %v738
          %v825 = vunpack.c.h.b16 %v738
          %v826 = vunpack.c.l.b16 %v739
          %v827 = vunpack.c.l.b16 %v740
          %v828 = vunpack.c.h.b16 %v740
          %v829 = vunpack.c.l.b16 %v741
          %v830 = vpack.c.b16 %v785, %v782
          %v831 = vpack.c.b16 %v786, %v783
          %v832 = vpack.c.b16 %v787, %v784
          %v833 = vpack.c.b16 %v791, %v788
          %v834 = vpack.c.b16 %v792, %v789
          %v835 = vpack.c.b16 %v793, %v790
          %v836 = vpack.c.b16 %v797, %v794
          %v837 = vpack.c.b16 %v798, %v795
          %v838 = vpack.c.b16 %v799, %v796
          %v839 = vpack.c.b16 %v803, %v800
          %v840 = vpack.c.b16 %v804, %v801
          %v841 = vpack.c.b16 %v805, %v802
          %v842 = vpack.c.b16 %v809, %v806
          %v843 = vpack.c.b16 %v810, %v807
          %v844 = vpack.c.b16 %v811, %v808
          %v845 = vpack.c.b16 %v815, %v812
          %v846 = vpack.c.b16 %v816, %v813
          %v847 = vpack.c.b16 %v817, %v814
          %v848 = vpack.c.b16 %v821, %v818
          %v849 = vpack.c.b16 %v822, %v819
          %v850 = vpack.c.b16 %v823, %v820
          %v851 = vpack.c.b16 %v827, %v824
          %v852 = vpack.c.b16 %v828, %v825
          %v853 = vpack.c.b16 %v829, %v826
          %878 = vmatpush.bf16.msra.mxu0 %v851
          %879 = vmatpush.bf16.msra.mxu0 %v848
          %880 = vmatpush.bf16.msra.mxu0 %v845
          %881 = vmatpush.bf16.msra.mxu0 %v842
          %882 = vmatpush.bf16.msra.mxu0 %v839
          %883 = vmatpush.bf16.msra.mxu0 %v836
          %884 = vmatpush.bf16.msra.mxu0 %v833
          %885 = vmatpush.bf16.msra.mxu0 %v830
          %886 = vmatmul.bf16.gmra.mxu0 %v708
          %v887 = vpop.f32.mrf.mxu0
          %v888 = vadd.f32 %v744, %v887
          %v889 = vpop.f32.mrf.mxu0
          %v890 = vadd.f32 %v744, %v889
          %891 = vmatmul.bf16.gmra.mxu0 %v709
          %v892 = vpop.f32.mrf.mxu0
          %v893 = vadd.f32 %v744, %v892
          %v894 = vpop.f32.mrf.mxu0
          %895 = vdwg.mxu0
          %896 = vmatpush.bf16.msra.mxu0 %v852
          %897 = vmatpush.bf16.msra.mxu0 %v849
          %898 = vmatpush.bf16.msra.mxu0 %v846
          %899 = vmatpush.bf16.msra.mxu0 %v843
          %900 = vmatpush.bf16.msra.mxu0 %v840
          %901 = vmatpush.bf16.msra.mxu0 %v837
          %902 = vmatpush.bf16.msra.mxu0 %v834
          %903 = vmatpush.bf16.msra.mxu0 %v831
          %904 = vmatmul.bf16.gmra.mxu0 %v708
          %v905 = vpop.f32.mrf.mxu0
          %v906 = vadd.f32 %v745, %v905
          %v907 = vpop.f32.mrf.mxu0
          %v908 = vadd.f32 %v745, %v907
          %909 = vmatmul.bf16.gmra.mxu0 %v709
          %v910 = vpop.f32.mrf.mxu0
          %v911 = vadd.f32 %v745, %v910
          %v912 = vpop.f32.mrf.mxu0
          %913 = vdwg.mxu0
          %914 = vmatpush.bf16.msra.mxu0 %v853
          %915 = vmatpush.bf16.msra.mxu0 %v850
          %916 = vmatpush.bf16.msra.mxu0 %v847
          %917 = vmatpush.bf16.msra.mxu0 %v844
          %918 = vmatpush.bf16.msra.mxu0 %v841
          %919 = vmatpush.bf16.msra.mxu0 %v838
          %920 = vmatpush.bf16.msra.mxu0 %v835
          %921 = vmatpush.bf16.msra.mxu0 %v832
          %922 = vmatmul.bf16.gmra.mxu0 %v708
          %v923 = vpop.f32.mrf.mxu0
          %v924 = vadd.f32 %v746, %v923
          %v925 = vpop.f32.mrf.mxu0
          %v926 = vadd.f32 %v746, %v925
          %927 = vmatmul.bf16.gmra.mxu0 %v709
          %v928 = vpop.f32.mrf.mxu0
          %v929 = vadd.f32 %v746, %v928
          %v930 = vpop.f32.mrf.mxu0
          %931 = vdwg.mxu0
          %v932 = vpack.c.bf16 %v906, %v888
          %v933 = vpack.c.bf16 %v924, %v924
          %v934 = vpack.c.bf16 %v908, %v890
          %v935 = vpack.c.bf16 %v926, %v926
          %v936 = vpack.c.bf16 %v911, %v893
          %v937 = vpack.c.bf16 %v929, %v929
          %vm938 = vcmask 257024
          %939 = vst.msk [vmem:[#allocation2] sm:$0xf] %vm938, %v932
          %940 = vst.msk [vmem:[#allocation2 + $0x4] sm:$0xf] %vm938, %v934
          %941 = vst.msk [vmem:[#allocation2 + $0x8] sm:$0xf] %vm938, %v936
          %v945 = vrot.slane %v932, 4
          %v946 = vrot.slane %v934, 4
          %v947 = vrot.slane %v936, 4
          %s951 = scalar_lea.vmem [#allocation2], 12
          %952 = vst.msk [vmem:[%s951] sm:$0xf] %vm938, %v945
          %953 = vst.msk [vmem:[%s951 + $0x4] sm:$0xf] %vm938, %v946
          %954 = vst.msk [vmem:[%s951 + $0x8] sm:$0xf] %vm938, %v947
          %s955 = scalar_lea.vmem [#allocation2], 24
          %956 = vst.msk [vmem:[%s955] sm:$0xf] %vm938, %v933
          %957 = vst.msk [vmem:[%s955 + $0x4] sm:$0xf] %vm938, %v935
          %958 = vst.msk [vmem:[%s955 + $0x8] sm:$0xf] %vm938, %v937
          %959 = vrot.lane.b32.xlu0 %v932, 96
          %v960 = vpop.permute.xlu0 %959
          %961 = vrot.lane.b32.xlu0 %v934, 96
          %v962 = vpop.permute.xlu0 %961
          %963 = vrot.lane.b32.xlu0 %v936, 96
          %v964 = vpop.permute.xlu0 %963
          %s968 = scalar_lea.vmem [#allocation2], 36
          %969 = vst.msk [vmem:[%s968] sm:$0xf] %vm938, %v960
          %970 = vst.msk [vmem:[%s968 + $0x4] sm:$0xf] %vm938, %v962
          %971 = vst.msk [vmem:[%s968 + $0x8] sm:$0xf] %vm938, %v964
          %v972 = vrot.slane %v960, 4
          %v973 = vrot.slane %v962, 4
          %v974 = vrot.slane %v964, 4
          %s978 = scalar_lea.vmem [#allocation2], 48
          %979 = vst.msk [vmem:[%s978] sm:$0xf] %vm938, %v972
          %980 = vst.msk [vmem:[%s978 + $0x4] sm:$0xf] %vm938, %v973
          %981 = vst.msk [vmem:[%s978 + $0x8] sm:$0xf] %vm938, %v974
          %985 = vrot.lane.b32.xlu0 %v933, 96
          %v986 = vpop.permute.xlu0 %985
          %987 = vrot.lane.b32.xlu0 %v935, 96
          %v988 = vpop.permute.xlu0 %987
          %989 = vrot.lane.b32.xlu0 %v937, 96
          %v990 = vpop.permute.xlu0 %989
          %s994 = scalar_lea.vmem [#allocation2], 60
          %995 = vst.msk [vmem:[%s994] sm:$0xf] %vm938, %v986
          %996 = vst.msk [vmem:[%s994 + $0x4] sm:$0xf] %vm938, %v988
          %997 = vst.msk [vmem:[%s994 + $0x8] sm:$0xf] %vm938, %v990
          %998 = vrot.lane.b32.xlu0 %v932, 64
          %v999 = vpop.permute.xlu0 %998
          %1000 = vrot.lane.b32.xlu0 %v934, 64
          %v1001 = vpop.permute.xlu0 %1000
          %1002 = vrot.lane.b32.xlu0 %v936, 64
          %v1003 = vpop.permute.xlu0 %1002
          %s1007 = scalar_lea.vmem [#allocation2], 72
          %1008 = vst.msk [vmem:[%s1007] sm:$0xf] %vm938, %v999
          %1009 = vst.msk [vmem:[%s1007 + $0x4] sm:$0xf] %vm938, %v1001
          %1010 = vst.msk [vmem:[%s1007 + $0x8] sm:$0xf] %vm938, %v1003
          %v1011 = vrot.slane %v999, 4
          %v1012 = vrot.slane %v1001, 4
          %v1013 = vrot.slane %v1003, 4
          %s1017 = scalar_lea.vmem [#allocation2], 84
          %1018 = vst.msk [vmem:[%s1017] sm:$0xf] %vm938, %v1011
          %1019 = vst.msk [vmem:[%s1017 + $0x4] sm:$0xf] %vm938, %v1012
          %1020 = vst.msk [vmem:[%s1017 + $0x8] sm:$0xf] %vm938, %v1013
          %1021 = vrot.lane.b32.xlu0 %v933, 64
          %v1022 = vpop.permute.xlu0 %1021
          %1023 = vrot.lane.b32.xlu0 %v935, 64
          %v1024 = vpop.permute.xlu0 %1023
          %1025 = vrot.lane.b32.xlu0 %v937, 64
          %v1026 = vpop.permute.xlu0 %1025
          %s1030 = scalar_lea.vmem [#allocation2], 96
          %1031 = vst.msk [vmem:[%s1030] sm:$0xf] %vm938, %v1022
          %1032 = vst.msk [vmem:[%s1030 + $0x4] sm:$0xf] %vm938, %v1024
          %1033 = vst.msk [vmem:[%s1030 + $0x8] sm:$0xf] %vm938, %v1026
          %1034 = vrot.lane.b32.xlu0 %v932, 32
          %v1035 = vpop.permute.xlu0 %1034
          %1036 = vrot.lane.b32.xlu0 %v934, 32
          %v1037 = vpop.permute.xlu0 %1036
          %1038 = vrot.lane.b32.xlu0 %v936, 32
          %v1039 = vpop.permute.xlu0 %1038
          %s1043 = scalar_lea.vmem [#allocation2], 108
          %1044 = vst.msk [vmem:[%s1043] sm:$0xf] %vm938, %v1035
          %1045 = vst.msk [vmem:[%s1043 + $0x4] sm:$0xf] %vm938, %v1037
          %1046 = vst.msk [vmem:[%s1043 + $0x8] sm:$0xf] %vm938, %v1039
          %v1047 = vrot.slane %v1035, 4
          %v1048 = vrot.slane %v1037, 4
          %v1049 = vrot.slane %v1039, 4
          %s1053 = scalar_lea.vmem [#allocation2], 120
          %1054 = vst.msk [vmem:[%s1053] sm:$0xf] %vm938, %v1047
          %1055 = vst.msk [vmem:[%s1053 + $0x4] sm:$0xf] %vm938, %v1048
          %1056 = vst.msk [vmem:[%s1053 + $0x8] sm:$0xf] %vm938, %v1049
          %1057 = vrot.lane.b32.xlu0 %v933, 32
          %v1058 = vpop.permute.xlu0 %1057
          %1059 = vrot.lane.b32.xlu0 %v935, 32
          %v1060 = vpop.permute.xlu0 %1059
          %1061 = vrot.lane.b32.xlu0 %v937, 32
          %v1062 = vpop.permute.xlu0 %1061
          %s1066 = scalar_lea.vmem [#allocation2], 132
          %1067 = vst.msk [vmem:[%s1066] sm:$0xf] %vm938, %v1058
          %1068 = vst.msk [vmem:[%s1066 + $0x4] sm:$0xf] %vm938, %v1060
          %1069 = vst.msk [vmem:[%s1066 + $0x8] sm:$0xf] %vm938, %v1062
          %1070 = vst [vmem:[#allocation3] sm:$0xff] 0.0
          %1071 = vst [vmem:[#allocation3 + $0x8] sm:$0xff] 0.0
          %1072 = vst [vmem:[#allocation3 + $0x10] sm:$0xff] 0.0
        $region112: #{tpu_custom_call.1} parent=71 // pred_fallthru
          _
        %s1073 = smul.u32 %s38, 3
        %s1074 = smul.u32 %s1073, 3
        %s1075 = smul.addr %s1074, 4
        %s1076 = scalar_lea.vmem [#allocation2], %s1075
        %v1077 = vld [vmem:[%s1076] sm:$0xf]
        %v1078 = vld [vmem:[%s1076 + $0x4] sm:$0xf]
        %v1079 = vld [vmem:[%s1076 + $0x8] sm:$0xf]
        %s1080 = sadd.s32 %s1073, 1
        %s1081 = smul.u32 %s1080, 3
        %s1082 = smul.addr %s1081, 4
        %s1083 = scalar_lea.vmem [#allocation2], %s1082
        %v1084 = vld [vmem:[%s1083] sm:$0xf]
        %v1085 = vld [vmem:[%s1083 + $0x4] sm:$0xf]
        %v1086 = vld [vmem:[%s1083 + $0x8] sm:$0xf]
        %s1087 = sadd.s32 %s1073, 2
        %s1088 = smul.u32 %s1087, 3
        %s1089 = smul.addr %s1088, 4
        %s1090 = scalar_lea.vmem [#allocation2], %s1089
        %v1091 = vld [vmem:[%s1090] sm:$0xf]
        %v1092 = vld [vmem:[%s1090 + $0x4] sm:$0xf]
        %v1093 = vld [vmem:[%s1090 + $0x8] sm:$0xf]
        %v1097 = vunpack.c.l.b16 %v1077
        %v1098 = vunpack.c.l.b16 %v1078
        %v1099 = vunpack.c.l.b16 %v1079
        %v1100 = vpack.c.b16 %v1098, %v1097
        %v1101 = vpack.c.b16 %v1099, %v1099
        %v1105 = vunpack.c.l.b16 %v1084
        %v1106 = vunpack.c.l.b16 %v1085
        %v1107 = vunpack.c.l.b16 %v1086
        %v1108 = vpack.c.b16 %v1106, %v1105
        %v1109 = vpack.c.b16 %v1107, %v1107
        %vm1110 = vcmask 261120
        %v1112 = vsel %vm1110, %v1100, 0
        %v1115 = vsel %vm1110, %v1101, 0
        %v1118 = vsel %vm1110, %v1108, 0
        %v1121 = vsel %vm1110, %v1109, 0
        %1123 = vmatpush.bf16.xpose.msra.mxu0 0
        %1124 = vmatpush.bf16.xpose.msra.mxu0 0
        %1125 = vmatpush.bf16.xpose.msra.mxu0 0
        %1126 = vmatpush.bf16.xpose.msra.mxu0 0
        %1127 = vmatpush.bf16.xpose.msra.mxu0 0
        %1128 = vmatpush.bf16.xpose.msra.mxu0 0
        %1129 = vmatpush.bf16.xpose.msra.mxu0 %v1121
        %1130 = vmatpush.bf16.xpose.msra.mxu0 %v1118
        %1131 = vmatmul.bf16.gmra.mxu0 %v1112
        %v1132 = vpop.f32.mrf.mxu0
        %v1133 = vadd.f32 0.0, %v1132
        %v1134 = vpop.f32.mrf.mxu0
        %v1135 = vadd.f32 0.0, %v1134
        %1136 = vmatmul.bf16.gmra.mxu0 %v1115
        %v1137 = vpop.f32.mrf.mxu0
        %v1138 = vadd.f32 0.0, %v1137
        %v1139 = vpop.f32.mrf.mxu0
        %1140 = vdwg.mxu0
        %vm1141 = vcmask 195584
        %v1142 = vsel %vm1141, %v1133, -inf
        %1143 = vmax.xlane.f32.xlu0 %v1142
        %v1144 = vpop.xlane.xlu0 %1143
        %v1145 = vsel %vm1141, %v1135, -inf
        %1146 = vmax.xlane.f32.xlu0 %v1145
        %v1147 = vpop.xlane.xlu0 %1146
        %v1148 = vsel %vm1141, %v1138, -inf
        %1149 = vmax.xlane.f32.xlu0 %v1148
        %v1150 = vpop.xlane.xlu0 %1149
        %v1151 = vsub.f32 %v1133, %v1144
        %v1152 = vsub.f32 %v1135, %v1147
        %v1153 = vsub.f32 %v1138, %v1150
        %v1154 = vmul.f32 %v1151, 1.442695
        %v1155 = vpow.pop %v1154
        %v1156 = vmul.f32 %v1152, 1.442695
        %v1157 = vpow.pop %v1156
        %v1158 = vmul.f32 %v1153, 1.442695
        %v1159 = vpow.pop %v1158
        %v1160 = vsel %vm1141, %v1155, 0.0
        %1161 = vadd.xlane.f32.xlu0 %v1160
        %v1162 = vpop.xlane.xlu0 %1161
        %v1163 = vsel %vm1141, %v1157, 0.0
        %1164 = vadd.xlane.f32.xlu0 %v1163
        %v1165 = vpop.xlane.xlu0 %1164
        %v1166 = vsel %vm1141, %v1159, 0.0
        %1167 = vadd.xlane.f32.xlu0 %v1166
        %v1168 = vpop.xlane.xlu0 %1167
        %v1169 = vrcp.pop %v1162
        %v1170 = vrcp.pop %v1165
        %v1171 = vrcp.pop %v1168
        %v1172 = vmul.f32 %v1155, %v1169
        %v1173 = vmul.f32 %v1157, %v1170
        %v1174 = vmul.f32 %v1159, %v1171
        %v1175 = vpack.c.bf16 %v1173, %v1172
        %v1176 = vpack.c.bf16 %v1174, %v1174
        %v1180 = vunpack.c.l.b16 %v1091
        %v1181 = vunpack.c.l.b16 %v1092
        %v1182 = vunpack.c.l.b16 %v1093
        %v1183 = vpack.c.b16 %v1181, %v1180
        %v1184 = vpack.c.b16 %v1182, %v1182
        %v1187 = vsel %vm1141, %v1175, 0
        %v1190 = vsel %vm1141, %v1176, 0
        %vm1192 = vcmask 1043456
        %v1194 = vsel %vm1192, %v1184, 0
        %1196 = vmatpush.bf16.msra.mxu0 0
        %1197 = vmatpush.bf16.msra.mxu0 0
        %1198 = vmatpush.bf16.msra.mxu0 0
        %1199 = vmatpush.bf16.msra.mxu0 0
        %1200 = vmatpush.bf16.msra.mxu0 0
        %1201 = vmatpush.bf16.msra.mxu0 0
        %1202 = vmatpush.bf16.msra.mxu0 %v1194
        %1203 = vmatpush.bf16.msra.mxu0 %v1183
        %1204 = vmatmul.bf16.gmra.mxu0 %v1187
        %v1205 = vpop.f32.mrf.mxu0
        %v1206 = vadd.f32 0.0, %v1205
        %v1207 = vpop.f32.mrf.mxu0
        %v1208 = vadd.f32 0.0, %v1207
        %1209 = vmatmul.bf16.gmra.mxu0 %v1190
        %v1210 = vpop.f32.mrf.mxu0
        %v1211 = vadd.f32 0.0, %v1210
        %v1212 = vpop.f32.mrf.mxu0
        %1213 = vdwg.mxu0
        %v1214 = vld [vmem:[#allocation3] sm:$0xff]
        %v1215 = vld [vmem:[#allocation3 + $0x8] sm:$0xff]
        %v1216 = vld [vmem:[#allocation3 + $0x10] sm:$0xff]
        %v1217 = vpack.c.bf16 %v1208, %v1206
        %v1218 = vpack.c.bf16 %v1211, %v1211
        %v1219 = vld [vmem:[%s560] sm:$0xf]
        %v1220 = vld [vmem:[%s560 + $0x4] sm:$0xf]
        %v1221 = vld [vmem:[%s560 + $0x8] sm:$0xf]
        %v1222 = vld [vmem:[%s560 + $0xc] sm:$0xf]
        %v1227 = vunpack.c.l.b16 %v1219
        %v1228 = vunpack.c.l.b16 %v1220
        %v1229 = vunpack.c.l.b16 %v1221
        %v1230 = vunpack.c.l.b16 %v1222
        %v1231 = vpack.c.b16 %v1228, %v1227
        %v1232 = vpack.c.b16 %v1230, %v1229
        %v1236 = vsel %vm1110, %v1217, 0
        %v1239 = vsel %vm1110, %v1218, 0
        %1241 = vmatpush.bf16.msra.mxu0 0
        %1242 = vmatpush.bf16.msra.mxu0 0
        %1243 = vmatpush.bf16.msra.mxu0 0
        %1244 = vmatpush.bf16.msra.mxu0 0
        %1245 = vmatpush.bf16.msra.mxu0 0
        %1246 = vmatpush.bf16.msra.mxu0 0
        %1247 = vmatpush.bf16.msra.mxu0 %v1232
        %1248 = vmatpush.bf16.msra.mxu0 %v1231
        %1249 = vmatmul.bf16.gmra.mxu0 %v1236
        %v1250 = vpop.f32.mrf.mxu0
        %v1251 = vadd.f32 0.0, %v1250
        %v1252 = vpop.f32.mrf.mxu0
        %v1253 = vadd.f32 0.0, %v1252
        %1254 = vmatmul.bf16.gmra.mxu0 %v1239
        %v1255 = vpop.f32.mrf.mxu0
        %v1256 = vadd.f32 0.0, %v1255
        %v1257 = vpop.f32.mrf.mxu0
        %1258 = vdwg.mxu0
        %v1259 = vadd.f32 %v1214, %v1251
        %v1260 = vadd.f32 %v1215, %v1253
        %v1261 = vadd.f32 %v1216, %v1256
        %1262 = vst [vmem:[#allocation3] sm:$0xff] %v1259
        %1263 = vst [vmem:[#allocation3 + $0x8] sm:$0xff] %v1260
        %1264 = vst [vmem:[#allocation3 + $0x10] sm:$0xff] %v1261
        %p1265 = scmp.eq.s32.totalorder %s38, 3
        // Predicated region
        $region113: #{tpu_custom_call.1} parent=71 // pred_check
          %p1266 = pneg %p1265
        $region114: #{tpu_custom_call.1} parent=71 // pred_check_branch
          %1268 = sbr.rel (%p1266) target = $region116
        $region115: #{tpu_custom_call.1} parent=71 // pred_region
          %v1269 = vld [vmem:[%s525] sm:$0xff]
          %v1270 = vld [vmem:[%s525 + $0x8] sm:$0xff]
          %v1271 = vld [vmem:[%s525 + $0x10] sm:$0xff]
          %v1272 = vld [vmem:[#allocation3] sm:$0xff]
          %v1273 = vld [vmem:[#allocation3 + $0x8] sm:$0xff]
          %v1274 = vld [vmem:[#allocation3 + $0x10] sm:$0xff]
          %v1275 = vadd.f32 %v1269, %v1272
          %v1276 = vadd.f32 %v1270, %v1273
          %v1277 = vadd.f32 %v1271, %v1274
          %v1278 = vld [vmem:[%s8] sm:$0x1]
          %v1280 = vperm.slane %v1278, 0
          %v1282 = vadd.f32 %v1275, %v1280
          %v1283 = vadd.f32 %v1276, %v1280
          %v1284 = vadd.f32 %v1277, %v1280
          %v1285 = vld [vmem:[#allocation10] sm:$0x1]
          %v1286 = vld [vmem:[#allocation12] sm:$0x1]
          %1287 = vadd.xlane.f32.xlu0 %v1282
          %v1288 = vpop.xlane.xlu0 %1287
          %1289 = vadd.xlane.f32.xlu0 %v1283
          %v1290 = vpop.xlane.xlu0 %1289
          %1291 = vadd.xlane.f32.xlu0 %v1284
          %v1292 = vpop.xlane.xlu0 %1291
          %v1293 = vrcp.pop 128.0
          %v1294 = vmul.f32 128.0, %v1293
          %v1295 = vsub.f32 1.0, %v1294
          %v1296 = vmul.f32 %v1293, %v1295
          %v1297 = vadd.f32 %v1293, %v1296
          %vm1298 = vweird.f32 %v1293
          %v1299 = vsel %vm1298, %v1293, %v1297
          %v1300 = vmul.f32 %v1288, %v1299
          %v1301 = vmul.f32 %v1290, %v1299
          %v1302 = vmul.f32 %v1292, %v1299
          %v1303 = vsub.f32 %v1282, %v1300
          %v1304 = vsub.f32 %v1283, %v1301
          %v1305 = vsub.f32 %v1284, %v1302
          %v1306 = vmul.f32 %v1303, %v1303
          %v1307 = vmul.f32 %v1304, %v1304
          %v1308 = vmul.f32 %v1305, %v1305
          %1309 = vadd.xlane.f32.xlu0 %v1306
          %v1310 = vpop.xlane.xlu0 %1309
          %1311 = vadd.xlane.f32.xlu0 %v1307
          %v1312 = vpop.xlane.xlu0 %1311
          %1313 = vadd.xlane.f32.xlu0 %v1308
          %v1314 = vpop.xlane.xlu0 %1313
          %v1315 = vmul.f32 %v1310, %v1299
          %v1316 = vmul.f32 %v1312, %v1299
          %v1317 = vmul.f32 %v1314, %v1299
          %v1318 = vadd.f32 %v1315, 1e-05
          %v1319 = vadd.f32 %v1316, 1e-05
          %v1320 = vadd.f32 %v1317, 1e-05
          %v1321 = vrsqrt.pop %v1318
          %v1322 = vmul.f32 %v1321, %v1318
          %v1323 = vmul.f32 %v1322, %v1321
          %v1324 = vmul.f32 0.5, %v1323
          %v1325 = vsub.f32 1.5, %v1324
          %v1326 = vmul.f32 %v1321, %v1325
          %vm1327 = vweird.f32 %v1318
          %vm1328 = vweird.f32 %v1321
          %vm1329 = vmor %vm1327, %vm1328
          %v1330 = vsel %vm1329, %v1321, %v1326
          %v1331 = vrsqrt.pop %v1319
          %v1332 = vmul.f32 %v1331, %v1319
          %v1333 = vmul.f32 %v1332, %v1331
          %v1334 = vmul.f32 0.5, %v1333
          %v1335 = vsub.f32 1.5, %v1334
          %v1336 = vmul.f32 %v1331, %v1335
          %vm1337 = vweird.f32 %v1319
          %vm1338 = vweird.f32 %v1331
          %vm1339 = vmor %vm1337, %vm1338
          %v1340 = vsel %vm1339, %v1331, %v1336
          %v1341 = vrsqrt.pop %v1320
          %v1342 = vmul.f32 %v1341, %v1320
          %v1343 = vmul.f32 %v1342, %v1341
          %v1344 = vmul.f32 0.5, %v1343
          %v1345 = vsub.f32 1.5, %v1344
          %v1346 = vmul.f32 %v1341, %v1345
          %vm1347 = vweird.f32 %v1320
          %vm1348 = vweird.f32 %v1341
          %vm1349 = vmor %vm1347, %vm1348
          %v1350 = vsel %vm1349, %v1341, %v1346
          %v1351 = vmul.f32 %v1303, %v1330
          %v1352 = vmul.f32 %v1304, %v1340
          %v1353 = vmul.f32 %v1305, %v1350
          %v1355 = vperm.slane %v1285, 0
          %v1357 = vmul.f32 %v1351, %v1355
          %v1358 = vmul.f32 %v1352, %v1355
          %v1359 = vmul.f32 %v1353, %v1355
          %v1361 = vperm.slane %v1286, 0
          %v1363 = vadd.f32 %v1357, %v1361
          %v1364 = vadd.f32 %v1358, %v1361
          %v1365 = vadd.f32 %v1359, %v1361
          %v1366 = vpack.c.bf16 %v1364, %v1363
          %v1367 = vpack.c.bf16 %v1365, %v1365
          %v1368 = vld [vmem:[#allocation16] sm:$0xff]
          %v1369 = vld [vmem:[#allocation16 + $0x8] sm:$0xff]
          %v1370 = vld [vmem:[#allocation16 + $0x10] sm:$0xff]
          %v1371 = vld [vmem:[#allocation16 + $0x18] sm:$0xff]
          %v1372 = vld [vmem:[#allocation16 + $0x20] sm:$0xff]
          %v1373 = vld [vmem:[#allocation16 + $0x28] sm:$0xff]
          %v1374 = vld [vmem:[#allocation16 + $0x30] sm:$0xff]
          %v1375 = vld [vmem:[#allocation16 + $0x38] sm:$0xff]
          %v1376 = vld [vmem:[#allocation16 + $0x40] sm:$0xff]
          %v1377 = vld [vmem:[#allocation16 + $0x48] sm:$0xff]
          %v1378 = vld [vmem:[#allocation16 + $0x50] sm:$0xff]
          %v1379 = vld [vmem:[#allocation16 + $0x58] sm:$0xff]
          %v1380 = vld [vmem:[#allocation16 + $0x60] sm:$0xff]
          %v1381 = vld [vmem:[#allocation16 + $0x68] sm:$0xff]
          %v1382 = vld [vmem:[#allocation16 + $0x70] sm:$0xff]
          %v1383 = vld [vmem:[#allocation16 + $0x78] sm:$0xff]
          %v1384 = vld [vmem:[%s10] sm:$0x3]
          %v1386 = vperm.slane %v1384, 0
          %v1387 = vperm.slane %v1384, 1
          %v1406 = vunpack.c.l.b16 %v1368
          %v1407 = vunpack.c.h.b16 %v1368
          %v1408 = vunpack.c.l.b16 %v1369
          %v1409 = vunpack.c.h.b16 %v1369
          %v1410 = vunpack.c.l.b16 %v1370
          %v1411 = vunpack.c.h.b16 %v1370
          %v1412 = vunpack.c.l.b16 %v1371
          %v1413 = vunpack.c.h.b16 %v1371
          %v1414 = vunpack.c.l.b16 %v1372
          %v1415 = vunpack.c.h.b16 %v1372
          %v1416 = vunpack.c.l.b16 %v1373
          %v1417 = vunpack.c.h.b16 %v1373
          %v1418 = vunpack.c.l.b16 %v1374
          %v1419 = vunpack.c.h.b16 %v1374
          %v1420 = vunpack.c.l.b16 %v1375
          %v1421 = vunpack.c.h.b16 %v1375
          %v1422 = vunpack.c.l.b16 %v1376
          %v1423 = vunpack.c.h.b16 %v1376
          %v1424 = vunpack.c.l.b16 %v1377
          %v1425 = vunpack.c.h.b16 %v1377
          %v1426 = vunpack.c.l.b16 %v1378
          %v1427 = vunpack.c.h.b16 %v1378
          %v1428 = vunpack.c.l.b16 %v1379
          %v1429 = vunpack.c.h.b16 %v1379
          %v1430 = vunpack.c.l.b16 %v1380
          %v1431 = vunpack.c.h.b16 %v1380
          %v1432 = vunpack.c.l.b16 %v1381
          %v1433 = vunpack.c.h.b16 %v1381
          %v1434 = vunpack.c.l.b16 %v1382
          %v1435 = vunpack.c.h.b16 %v1382
          %v1436 = vunpack.c.l.b16 %v1383
          %v1437 = vunpack.c.h.b16 %v1383
          %v1438 = vpack.c.b16 %v1408, %v1406
          %v1439 = vpack.c.b16 %v1409, %v1407
          %v1440 = vpack.c.b16 %v1412, %v1410
          %v1441 = vpack.c.b16 %v1413, %v1411
          %v1442 = vpack.c.b16 %v1416, %v1414
          %v1443 = vpack.c.b16 %v1417, %v1415
          %v1444 = vpack.c.b16 %v1420, %v1418
          %v1445 = vpack.c.b16 %v1421, %v1419
          %v1446 = vpack.c.b16 %v1424, %v1422
          %v1447 = vpack.c.b16 %v1425, %v1423
          %v1448 = vpack.c.b16 %v1428, %v1426
          %v1449 = vpack.c.b16 %v1429, %v1427
          %v1450 = vpack.c.b16 %v1432, %v1430
          %v1451 = vpack.c.b16 %v1433, %v1431
          %v1452 = vpack.c.b16 %v1436, %v1434
          %v1453 = vpack.c.b16 %v1437, %v1435
          %1470 = vmatpush.bf16.msra.mxu0 %v1452
          %1471 = vmatpush.bf16.msra.mxu0 %v1450
          %1472 = vmatpush.bf16.msra.mxu0 %v1448
          %1473 = vmatpush.bf16.msra.mxu0 %v1446
          %1474 = vmatpush.bf16.msra.mxu0 %v1444
          %1475 = vmatpush.bf16.msra.mxu0 %v1442
          %1476 = vmatpush.bf16.msra.mxu0 %v1440
          %1477 = vmatpush.bf16.msra.mxu0 %v1438
          %1478 = vmatmul.bf16.gmra.mxu0 %v1366
          %v1479 = vpop.f32.mrf.mxu0
          %v1480 = vadd.f32 %v1386, %v1479
          %v1481 = vpop.f32.mrf.mxu0
          %v1482 = vadd.f32 %v1386, %v1481
          %1483 = vmatmul.bf16.gmra.mxu0 %v1367
          %v1484 = vpop.f32.mrf.mxu0
          %v1485 = vadd.f32 %v1386, %v1484
          %v1486 = vpop.f32.mrf.mxu0
          %1487 = vdwg.mxu0
          %1488 = vmatpush.bf16.msra.mxu0 %v1453
          %1489 = vmatpush.bf16.msra.mxu0 %v1451
          %1490 = vmatpush.bf16.msra.mxu0 %v1449
          %1491 = vmatpush.bf16.msra.mxu0 %v1447
          %1492 = vmatpush.bf16.msra.mxu0 %v1445
          %1493 = vmatpush.bf16.msra.mxu0 %v1443
          %1494 = vmatpush.bf16.msra.mxu0 %v1441
          %1495 = vmatpush.bf16.msra.mxu0 %v1439
          %1496 = vmatmul.bf16.gmra.mxu0 %v1366
          %v1497 = vpop.f32.mrf.mxu0
          %v1498 = vadd.f32 %v1387, %v1497
          %v1499 = vpop.f32.mrf.mxu0
          %v1500 = vadd.f32 %v1387, %v1499
          %1501 = vmatmul.bf16.gmra.mxu0 %v1367
          %v1502 = vpop.f32.mrf.mxu0
          %v1503 = vadd.f32 %v1387, %v1502
          %v1504 = vpop.f32.mrf.mxu0
          %1505 = vdwg.mxu0
          %v1506 = vmul.f32 %v1480, 0.5
          %v1507 = vmul.f32 %v1498, 0.5
          %v1508 = vmul.f32 %v1482, 0.5
          %v1509 = vmul.f32 %v1500, 0.5
          %v1510 = vmul.f32 %v1485, 0.5
          %v1511 = vmul.f32 %v1503, 0.5
          %v1512 = vmul.f32 %v1480, 0.70710677
          %v1513 = vmul.f32 %v1498, 0.70710677
          %v1514 = vmul.f32 %v1482, 0.70710677
          %v1515 = vmul.f32 %v1500, 0.70710677
          %v1516 = vmul.f32 %v1485, 0.70710677
          %v1517 = vmul.f32 %v1503, 0.70710677
          %v1518 = vmul.f32 %v1512, %v1512
          %v1519 = vmin.f32 16.0, %v1518
          %v1520 = vmul.f32 %v1519, 2.1237322e-06
          %v1521 = vadd.f32 %v1520, 0.00028619796
          %v1522 = vmul.f32 %v1519, %v1521
          %v1523 = vadd.f32 %v1522, 0.0036580483
          %v1524 = vmul.f32 %v1519, %v1523
          %v1525 = vadd.f32 %v1524, 0.05243302
          %v1526 = vmul.f32 %v1519, %v1525
          %v1527 = vadd.f32 %v1526, 0.18741608
          %v1528 = vmul.f32 %v1519, %v1527
          %v1529 = vadd.f32 %v1528, 1.1283791
          %v1530 = vmul.f32 %v1512, %v1529
          %v1531 = vmul.f32 %v1519, 3.8918573e-05
          %v1532 = vadd.f32 %v1531, 0.001143296
          %v1533 = vmul.f32 %v1519, %v1532
          %v1534 = vadd.f32 %v1533, 0.014752088
          %v1535 = vmul.f32 %v1519, %v1534
          %v1536 = vadd.f32 %v1535, 0.112945676
          %v1537 = vmul.f32 %v1519, %v1536
          %v1538 = vadd.f32 %v1537, 0.4994258
          %v1539 = vmul.f32 %v1519, %v1538
          %v1540 = vadd.f32 %v1539, 1.0
          %v1541 = vrcp.pop %v1540
          %v1542 = vmul.f32 %v1540, %v1541
          %v1543 = vsub.f32 1.0, %v1542
          %v1544 = vmul.f32 %v1541, %v1543
          %v1545 = vadd.f32 %v1541, %v1544
          %vm1546 = vweird.f32 %v1540
          %vm1547 = vweird.f32 %v1541
          %vm1548 = vmor %vm1546, %vm1547
          %v1549 = vsel %vm1548, %v1541, %v1545
          %v1550 = vand.u32 2147483647, %v1540
          %vm1551 = vcmp.eq.f32.partialorder %v1550, 8.507059e+37
          %v1552 = vand.u32 %v1540, 2147483648
          %v1553 = vor.u32 1.1754944e-38, %v1552
          %v1554 = vsel %vm1551, %v1553, %v1549
          %v1555 = vmul.f32 %v1530, %v1554
          %v1556 = vmin.f32 %v1555, 1.0
          %v1557 = vmax.f32 %v1556, -1.0
          %v1558 = vmul.f32 %v1513, %v1513
          %v1559 = vmin.f32 16.0, %v1558
          %v1560 = vmul.f32 %v1559, 2.1237322e-06
          %v1561 = vadd.f32 %v1560, 0.00028619796
          %v1562 = vmul.f32 %v1559, %v1561
          %v1563 = vadd.f32 %v1562, 0.0036580483
          %v1564 = vmul.f32 %v1559, %v1563
          %v1565 = vadd.f32 %v1564, 0.05243302
          %v1566 = vmul.f32 %v1559, %v1565
          %v1567 = vadd.f32 %v1566, 0.18741608
          %v1568 = vmul.f32 %v1559, %v1567
          %v1569 = vadd.f32 %v1568, 1.1283791
          %v1570 = vmul.f32 %v1513, %v1569
          %v1571 = vmul.f32 %v1559, 3.8918573e-05
          %v1572 = vadd.f32 %v1571, 0.001143296
          %v1573 = vmul.f32 %v1559, %v1572
          %v1574 = vadd.f32 %v1573, 0.014752088
          %v1575 = vmul.f32 %v1559, %v1574
          %v1576 = vadd.f32 %v1575, 0.112945676
          %v1577 = vmul.f32 %v1559, %v1576
          %v1578 = vadd.f32 %v1577, 0.4994258
          %v1579 = vmul.f32 %v1559, %v1578
          %v1580 = vadd.f32 %v1579, 1.0
          %v1581 = vrcp.pop %v1580
          %v1582 = vmul.f32 %v1580, %v1581
          %v1583 = vsub.f32 1.0, %v1582
          %v1584 = vmul.f32 %v1581, %v1583
          %v1585 = vadd.f32 %v1581, %v1584
          %vm1586 = vweird.f32 %v1580
          %vm1587 = vweird.f32 %v1581
          %vm1588 = vmor %vm1586, %vm1587
          %v1589 = vsel %vm1588, %v1581, %v1585
          %v1590 = vand.u32 2147483647, %v1580
          %vm1591 = vcmp.eq.f32.partialorder %v1590, 8.507059e+37
          %v1592 = vand.u32 %v1580, 2147483648
          %v1593 = vor.u32 1.1754944e-38, %v1592
          %v1594 = vsel %vm1591, %v1593, %v1589
          %v1595 = vmul.f32 %v1570, %v1594
          %v1596 = vmin.f32 %v1595, 1.0
          %v1597 = vmax.f32 %v1596, -1.0
          %v1598 = vmul.f32 %v1514, %v1514
          %v1599 = vmin.f32 16.0, %v1598
          %v1600 = vmul.f32 %v1599, 2.1237322e-06
          %v1601 = vadd.f32 %v1600, 0.00028619796
          %v1602 = vmul.f32 %v1599, %v1601
          %v1603 = vadd.f32 %v1602, 0.0036580483
          %v1604 = vmul.f32 %v1599, %v1603
          %v1605 = vadd.f32 %v1604, 0.05243302
          %v1606 = vmul.f32 %v1599, %v1605
          %v1607 = vadd.f32 %v1606, 0.18741608
          %v1608 = vmul.f32 %v1599, %v1607
          %v1609 = vadd.f32 %v1608, 1.1283791
          %v1610 = vmul.f32 %v1514, %v1609
          %v1611 = vmul.f32 %v1599, 3.8918573e-05
          %v1612 = vadd.f32 %v1611, 0.001143296
          %v1613 = vmul.f32 %v1599, %v1612
          %v1614 = vadd.f32 %v1613, 0.014752088
          %v1615 = vmul.f32 %v1599, %v1614
          %v1616 = vadd.f32 %v1615, 0.112945676
          %v1617 = vmul.f32 %v1599, %v1616
          %v1618 = vadd.f32 %v1617, 0.4994258
          %v1619 = vmul.f32 %v1599, %v1618
          %v1620 = vadd.f32 %v1619, 1.0
          %v1621 = vrcp.pop %v1620
          %v1622 = vmul.f32 %v1620, %v1621
          %v1623 = vsub.f32 1.0, %v1622
          %v1624 = vmul.f32 %v1621, %v1623
          %v1625 = vadd.f32 %v1621, %v1624
          %vm1626 = vweird.f32 %v1620
          %vm1627 = vweird.f32 %v1621
          %vm1628 = vmor %vm1626, %vm1627
          %v1629 = vsel %vm1628, %v1621, %v1625
          %v1630 = vand.u32 2147483647, %v1620
          %vm1631 = vcmp.eq.f32.partialorder %v1630, 8.507059e+37
          %v1632 = vand.u32 %v1620, 2147483648
          %v1633 = vor.u32 1.1754944e-38, %v1632
          %v1634 = vsel %vm1631, %v1633, %v1629
          %v1635 = vmul.f32 %v1610, %v1634
          %v1636 = vmin.f32 %v1635, 1.0
          %v1637 = vmax.f32 %v1636, -1.0
          %v1638 = vmul.f32 %v1515, %v1515
          %v1639 = vmin.f32 16.0, %v1638
          %v1640 = vmul.f32 %v1639, 2.1237322e-06
          %v1641 = vadd.f32 %v1640, 0.00028619796
          %v1642 = vmul.f32 %v1639, %v1641
          %v1643 = vadd.f32 %v1642, 0.0036580483
          %v1644 = vmul.f32 %v1639, %v1643
          %v1645 = vadd.f32 %v1644, 0.05243302
          %v1646 = vmul.f32 %v1639, %v1645
          %v1647 = vadd.f32 %v1646, 0.18741608
          %v1648 = vmul.f32 %v1639, %v1647
          %v1649 = vadd.f32 %v1648, 1.1283791
          %v1650 = vmul.f32 %v1515, %v1649
          %v1651 = vmul.f32 %v1639, 3.8918573e-05
          %v1652 = vadd.f32 %v1651, 0.001143296
          %v1653 = vmul.f32 %v1639, %v1652
          %v1654 = vadd.f32 %v1653, 0.014752088
          %v1655 = vmul.f32 %v1639, %v1654
          %v1656 = vadd.f32 %v1655, 0.112945676
          %v1657 = vmul.f32 %v1639, %v1656
          %v1658 = vadd.f32 %v1657, 0.4994258
          %v1659 = vmul.f32 %v1639, %v1658
          %v1660 = vadd.f32 %v1659, 1.0
          %v1661 = vrcp.pop %v1660
          %v1662 = vmul.f32 %v1660, %v1661
          %v1663 = vsub.f32 1.0, %v1662
          %v1664 = vmul.f32 %v1661, %v1663
          %v1665 = vadd.f32 %v1661, %v1664
          %vm1666 = vweird.f32 %v1660
          %vm1667 = vweird.f32 %v1661
          %vm1668 = vmor %vm1666, %vm1667
          %v1669 = vsel %vm1668, %v1661, %v1665
          %v1670 = vand.u32 2147483647, %v1660
          %vm1671 = vcmp.eq.f32.partialorder %v1670, 8.507059e+37
          %v1672 = vand.u32 %v1660, 2147483648
          %v1673 = vor.u32 1.1754944e-38, %v1672
          %v1674 = vsel %vm1671, %v1673, %v1669
          %v1675 = vmul.f32 %v1650, %v1674
          %v1676 = vmin.f32 %v1675, 1.0
          %v1677 = vmax.f32 %v1676, -1.0
          %v1678 = vmul.f32 %v1516, %v1516
          %v1679 = vmin.f32 16.0, %v1678
          %v1680 = vmul.f32 %v1679, 2.1237322e-06
          %v1681 = vadd.f32 %v1680, 0.00028619796
          %v1682 = vmul.f32 %v1679, %v1681
          %v1683 = vadd.f32 %v1682, 0.0036580483
          %v1684 = vmul.f32 %v1679, %v1683
          %v1685 = vadd.f32 %v1684, 0.05243302
          %v1686 = vmul.f32 %v1679, %v1685
          %v1687 = vadd.f32 %v1686, 0.18741608
          %v1688 = vmul.f32 %v1679, %v1687
          %v1689 = vadd.f32 %v1688, 1.1283791
          %v1690 = vmul.f32 %v1516, %v1689
          %v1691 = vmul.f32 %v1679, 3.8918573e-05
          %v1692 = vadd.f32 %v1691, 0.001143296
          %v1693 = vmul.f32 %v1679, %v1692
          %v1694 = vadd.f32 %v1693, 0.014752088
          %v1695 = vmul.f32 %v1679, %v1694
          %v1696 = vadd.f32 %v1695, 0.112945676
          %v1697 = vmul.f32 %v1679, %v1696
          %v1698 = vadd.f32 %v1697, 0.4994258
          %v1699 = vmul.f32 %v1679, %v1698
          %v1700 = vadd.f32 %v1699, 1.0
          %v1701 = vrcp.pop %v1700
          %v1702 = vmul.f32 %v1700, %v1701
          %v1703 = vsub.f32 1.0, %v1702
          %v1704 = vmul.f32 %v1701, %v1703
          %v1705 = vadd.f32 %v1701, %v1704
          %vm1706 = vweird.f32 %v1700
          %vm1707 = vweird.f32 %v1701
          %vm1708 = vmor %vm1706, %vm1707
          %v1709 = vsel %vm1708, %v1701, %v1705
          %v1710 = vand.u32 2147483647, %v1700
          %vm1711 = vcmp.eq.f32.partialorder %v1710, 8.507059e+37
          %v1712 = vand.u32 %v1700, 2147483648
          %v1713 = vor.u32 1.1754944e-38, %v1712
          %v1714 = vsel %vm1711, %v1713, %v1709
          %v1715 = vmul.f32 %v1690, %v1714
          %v1716 = vmin.f32 %v1715, 1.0
          %v1717 = vmax.f32 %v1716, -1.0
          %v1718 = vmul.f32 %v1517, %v1517
          %v1719 = vmin.f32 16.0, %v1718
          %v1720 = vmul.f32 %v1719, 2.1237322e-06
          %v1721 = vadd.f32 %v1720, 0.00028619796
          %v1722 = vmul.f32 %v1719, %v1721
          %v1723 = vadd.f32 %v1722, 0.0036580483
          %v1724 = vmul.f32 %v1719, %v1723
          %v1725 = vadd.f32 %v1724, 0.05243302
          %v1726 = vmul.f32 %v1719, %v1725
          %v1727 = vadd.f32 %v1726, 0.18741608
          %v1728 = vmul.f32 %v1719, %v1727
          %v1729 = vadd.f32 %v1728, 1.1283791
          %v1730 = vmul.f32 %v1517, %v1729
          %v1731 = vmul.f32 %v1719, 3.8918573e-05
          %v1732 = vadd.f32 %v1731, 0.001143296
          %v1733 = vmul.f32 %v1719, %v1732
          %v1734 = vadd.f32 %v1733, 0.014752088
          %v1735 = vmul.f32 %v1719, %v1734
          %v1736 = vadd.f32 %v1735, 0.112945676
          %v1737 = vmul.f32 %v1719, %v1736
          %v1738 = vadd.f32 %v1737, 0.4994258
          %v1739 = vmul.f32 %v1719, %v1738
          %v1740 = vadd.f32 %v1739, 1.0
          %v1741 = vrcp.pop %v1740
          %v1742 = vmul.f32 %v1740, %v1741
          %v1743 = vsub.f32 1.0, %v1742
          %v1744 = vmul.f32 %v1741, %v1743
          %v1745 = vadd.f32 %v1741, %v1744
          %vm1746 = vweird.f32 %v1740
          %vm1747 = vweird.f32 %v1741
          %vm1748 = vmor %vm1746, %vm1747
          %v1749 = vsel %vm1748, %v1741, %v1745
          %v1750 = vand.u32 2147483647, %v1740
          %vm1751 = vcmp.eq.f32.partialorder %v1750, 8.507059e+37
          %v1752 = vand.u32 %v1740, 2147483648
          %v1753 = vor.u32 1.1754944e-38, %v1752
          %v1754 = vsel %vm1751, %v1753, %v1749
          %v1755 = vmul.f32 %v1730, %v1754
          %v1756 = vmin.f32 %v1755, 1.0
          %v1757 = vmax.f32 %v1756, -1.0
          %v1758 = vadd.f32 %v1557, 1.0
          %v1759 = vadd.f32 %v1597, 1.0
          %v1760 = vadd.f32 %v1637, 1.0
          %v1761 = vadd.f32 %v1677, 1.0
          %v1762 = vadd.f32 %v1717, 1.0
          %v1763 = vadd.f32 %v1757, 1.0
          %v1764 = vmul.f32 %v1506, %v1758
          %v1765 = vmul.f32 %v1507, %v1759
          %v1766 = vmul.f32 %v1508, %v1760
          %v1767 = vmul.f32 %v1509, %v1761
          %v1768 = vmul.f32 %v1510, %v1762
          %v1769 = vmul.f32 %v1511, %v1763
          %v1770 = vpack.c.bf16 %v1766, %v1764
          %v1771 = vpack.c.bf16 %v1767, %v1765
          %v1772 = vpack.c.bf16 %v1768, %v1768
          %v1773 = vpack.c.bf16 %v1769, %v1769
          %v1774 = vld [vmem:[#allocation17] sm:$0xf]
          %v1775 = vld [vmem:[#allocation17 + $0x4] sm:$0xf]
          %v1776 = vld [vmem:[#allocation17 + $0x8] sm:$0xf]
          %v1777 = vld [vmem:[#allocation17 + $0xc] sm:$0xf]
          %v1778 = vld [vmem:[#allocation17 + $0x10] sm:$0xf]
          %v1779 = vld [vmem:[#allocation17 + $0x14] sm:$0xf]
          %v1780 = vld [vmem:[#allocation17 + $0x18] sm:$0xf]
          %v1781 = vld [vmem:[#allocation17 + $0x1c] sm:$0xf]
          %v1782 = vld [vmem:[#allocation17 + $0x20] sm:$0xf]
          %v1783 = vld [vmem:[#allocation17 + $0x24] sm:$0xf]
          %v1784 = vld [vmem:[#allocation17 + $0x28] sm:$0xf]
          %v1785 = vld [vmem:[#allocation17 + $0x2c] sm:$0xf]
          %v1786 = vld [vmem:[#allocation17 + $0x30] sm:$0xf]
          %v1787 = vld [vmem:[#allocation17 + $0x34] sm:$0xf]
          %v1788 = vld [vmem:[#allocation17 + $0x38] sm:$0xf]
          %v1789 = vld [vmem:[#allocation17 + $0x3c] sm:$0xf]
          %v1790 = vld [vmem:[#allocation17 + $0x40] sm:$0xf]
          %v1791 = vld [vmem:[#allocation17 + $0x44] sm:$0xf]
          %v1792 = vld [vmem:[#allocation17 + $0x48] sm:$0xf]
          %v1793 = vld [vmem:[#allocation17 + $0x4c] sm:$0xf]
          %v1794 = vld [vmem:[#allocation17 + $0x50] sm:$0xf]
          %v1795 = vld [vmem:[#allocation17 + $0x54] sm:$0xf]
          %v1796 = vld [vmem:[#allocation17 + $0x58] sm:$0xf]
          %v1797 = vld [vmem:[#allocation17 + $0x5c] sm:$0xf]
          %v1798 = vld [vmem:[#allocation17 + $0x60] sm:$0xf]
          %v1799 = vld [vmem:[#allocation17 + $0x64] sm:$0xf]
          %v1800 = vld [vmem:[#allocation17 + $0x68] sm:$0xf]
          %v1801 = vld [vmem:[#allocation17 + $0x6c] sm:$0xf]
          %v1802 = vld [vmem:[#allocation17 + $0x70] sm:$0xf]
          %v1803 = vld [vmem:[#allocation17 + $0x74] sm:$0xf]
          %v1804 = vld [vmem:[#allocation17 + $0x78] sm:$0xf]
          %v1805 = vld [vmem:[#allocation17 + $0x7c] sm:$0xf]
          %v1806 = vld [vmem:[%s12] sm:$0x1]
          %v1808 = vperm.slane %v1806, 0
          %v1842 = vunpack.c.l.b16 %v1774
          %v1843 = vunpack.c.l.b16 %v1775
          %v1844 = vunpack.c.l.b16 %v1776
          %v1845 = vunpack.c.l.b16 %v1777
          %v1846 = vunpack.c.l.b16 %v1778
          %v1847 = vunpack.c.l.b16 %v1779
          %v1848 = vunpack.c.l.b16 %v1780
          %v1849 = vunpack.c.l.b16 %v1781
          %v1850 = vunpack.c.l.b16 %v1782
          %v1851 = vunpack.c.l.b16 %v1783
          %v1852 = vunpack.c.l.b16 %v1784
          %v1853 = vunpack.c.l.b16 %v1785
          %v1854 = vunpack.c.l.b16 %v1786
          %v1855 = vunpack.c.l.b16 %v1787
          %v1856 = vunpack.c.l.b16 %v1788
          %v1857 = vunpack.c.l.b16 %v1789
          %v1858 = vunpack.c.l.b16 %v1790
          %v1859 = vunpack.c.l.b16 %v1791
          %v1860 = vunpack.c.l.b16 %v1792
          %v1861 = vunpack.c.l.b16 %v1793
          %v1862 = vunpack.c.l.b16 %v1794
          %v1863 = vunpack.c.l.b16 %v1795
          %v1864 = vunpack.c.l.b16 %v1796
          %v1865 = vunpack.c.l.b16 %v1797
          %v1866 = vunpack.c.l.b16 %v1798
          %v1867 = vunpack.c.l.b16 %v1799
          %v1868 = vunpack.c.l.b16 %v1800
          %v1869 = vunpack.c.l.b16 %v1801
          %v1870 = vunpack.c.l.b16 %v1802
          %v1871 = vunpack.c.l.b16 %v1803
          %v1872 = vunpack.c.l.b16 %v1804
          %v1873 = vunpack.c.l.b16 %v1805
          %v1874 = vpack.c.b16 %v1843, %v1842
          %v1875 = vpack.c.b16 %v1845, %v1844
          %v1876 = vpack.c.b16 %v1847, %v1846
          %v1877 = vpack.c.b16 %v1849, %v1848
          %v1878 = vpack.c.b16 %v1851, %v1850
          %v1879 = vpack.c.b16 %v1853, %v1852
          %v1880 = vpack.c.b16 %v1855, %v1854
          %v1881 = vpack.c.b16 %v1857, %v1856
          %v1882 = vpack.c.b16 %v1859, %v1858
          %v1883 = vpack.c.b16 %v1861, %v1860
          %v1884 = vpack.c.b16 %v1863, %v1862
          %v1885 = vpack.c.b16 %v1865, %v1864
          %v1886 = vpack.c.b16 %v1867, %v1866
          %v1887 = vpack.c.b16 %v1869, %v1868
          %v1888 = vpack.c.b16 %v1871, %v1870
          %v1889 = vpack.c.b16 %v1873, %v1872
          %1906 = vmatpush.bf16.msra.mxu0 %v1881
          %1907 = vmatpush.bf16.msra.mxu0 %v1880
          %1908 = vmatpush.bf16.msra.mxu0 %v1879
          %1909 = vmatpush.bf16.msra.mxu0 %v1878
          %1910 = vmatpush.bf16.msra.mxu0 %v1877
          %1911 = vmatpush.bf16.msra.mxu0 %v1876
          %1912 = vmatpush.bf16.msra.mxu0 %v1875
          %1913 = vmatpush.bf16.msra.mxu0 %v1874
          %1914 = vmatmul.bf16.gmra.mxu0 %v1770
          %v1915 = vpop.f32.mrf.mxu0
          %v1916 = vadd.f32 %v1808, %v1915
          %v1917 = vpop.f32.mrf.mxu0
          %v1918 = vadd.f32 %v1808, %v1917
          %1919 = vmatmul.bf16.gmra.mxu0 %v1772
          %v1920 = vpop.f32.mrf.mxu0
          %v1921 = vadd.f32 %v1808, %v1920
          %v1922 = vpop.f32.mrf.mxu0
          %1923 = vdwg.mxu0
          %1924 = vmatpush.bf16.msra.mxu0 %v1889
          %1925 = vmatpush.bf16.msra.mxu0 %v1888
          %1926 = vmatpush.bf16.msra.mxu0 %v1887
          %1927 = vmatpush.bf16.msra.mxu0 %v1886
          %1928 = vmatpush.bf16.msra.mxu0 %v1885
          %1929 = vmatpush.bf16.msra.mxu0 %v1884
          %1930 = vmatpush.bf16.msra.mxu0 %v1883
          %1931 = vmatpush.bf16.msra.mxu0 %v1882
          %1932 = vmatmul.bf16.gmra.mxu0 %v1771
          %v1933 = vpop.f32.mrf.mxu0
          %v1934 = vadd.f32 %v1916, %v1933
          %v1935 = vpop.f32.mrf.mxu0
          %v1936 = vadd.f32 %v1918, %v1935
          %1937 = vmatmul.bf16.gmra.mxu0 %v1773
          %v1938 = vpop.f32.mrf.mxu0
          %v1939 = vadd.f32 %v1921, %v1938
          %v1940 = vpop.f32.mrf.mxu0
          %1941 = vdwg.mxu0
          %v1942 = vadd.f32 %v1282, %v1934
          %v1943 = vadd.f32 %v1283, %v1936
          %v1944 = vadd.f32 %v1284, %v1939
          %1945 = vst [vmem:[%s618] sm:$0xff] %v1942
          %1946 = vst [vmem:[%s618 + $0x8] sm:$0xff] %v1943
          %1947 = vst [vmem:[%s618 + $0x10] sm:$0xff] %v1944
        $region116: #{tpu_custom_call.1} parent=71 // pred_fallthru
          _
        %s1948 = sand.u32 %s336, 1
        %s1949 = scalar_lea.sflag [#allocation6], %s1948
        %s1950 = sand.u32 %s336, 1
        %s1951 = smul.addr %s1950, 24
        %s1952 = scalar_lea.vmem [#allocation18], %s1951
        // Predicated region
        $region117: #{tpu_custom_call.1} parent=71 // pred_check
          %p1953 = pneg %p346
        $region118: #{tpu_custom_call.1} parent=71 // pred_check_branch
          %1955 = sbr.rel (%p1953) target = $region120
        $region119: #{tpu_custom_call.1} parent=71 // pred_region
          %1957 = vsyncadd %s1949, 0
          %s1958 = smul.addr %s37, 3
          %s1959 = smul.addr %s1958, 8
          %s1960 = scalar_lea.hbm %s13, %s1959
          %s1961 = sshll.u32 %s1952, 4
          %s1962 = int_to_ptr.vmem [resolvable:$true] %s1961
          %s1963 = sshll.u32 %s1960, 4
          %s1964 = int_to_ptr.hbm [resolvable:$true] %s1963
          %1969 = dma.vmem_to_hbm [thread:$0]  %s1962, 384, %s1964, %s1949, 128, 128, 8
        $region120: #{tpu_custom_call.1} parent=71 // pred_fallthru
          _
      $region72: #{tpu_custom_call.1} parent=5 // pred_fallthru
        _
      %p1970 = scmp.le.s32.totalorder 2, %s28
      // Predicated region
      $region121: #{tpu_custom_call.1} parent=5 // pred_check
        %p1971 = pneg %p1970
      $region122: #{tpu_custom_call.1} parent=5 // pred_check_branch
        %1973 = sbr.rel (%p1971) target = $region124
      $region123: #{tpu_custom_call.1} parent=5 // pred_region
        %s1974 = ssub.s32 %s28, 2
        // Predicated region
        $region125: #{tpu_custom_call.1} parent=123 // pred_check
          %p1975 = pneg %p352
        $region126: #{tpu_custom_call.1} parent=123 // pred_check_branch
          %1977 = sbr.rel (%p1975) target = $region128
        $region127: #{tpu_custom_call.1} parent=123 // pred_region
          %s1978 = sand.u32 %s337, 1
          %s1979 = scalar_lea.sflag [#allocation6], %s1978
          %s1980 = sand.u32 %s337, 1
          %s1981 = smul.addr %s1980, 24
          %s1982 = scalar_lea.vmem [#allocation18], %s1981
          %1984 = dma.done %s1979, 384
        $region128: #{tpu_custom_call.1} parent=123 // pred_fallthru
          _
      $region124: #{tpu_custom_call.1} parent=5 // pred_fallthru
        _
    $region6: #{tpu_custom_call.1} parent=1 // loop_footer
      %s32 = sadd.s32 1, %s28
    $region7: #{tpu_custom_call.1} parent=1 // loop_footer_branch
      %27 = sbr.rel target = $region3
    $region8: #{tpu_custom_call.1} parent=1 // loop_exit
      _
    %1985 = vsyncpa [#allocation5], 1
    %s1986 = scalar_lea.sflag [#allocation5], 1
    %1987 = vsyncpa %s1986, 1
    %1988 = vsyncpa [#allocation8], 1
    %1989 = vsyncpa [#allocation11], 1
    %1990 = vsyncpa [#allocation14], 1
    %1991 = vsyncpa [#allocation6], 1
    %s1992 = scalar_lea.sflag [#allocation6], 1
    %1993 = vsyncpa %s1992, 1

</llo_original>
